<compile_context>
chip_gen: v7x
topology: tpu7x:2x2x1
jax: 0.10.0
libtpu: 0.0.40
codegen_flags: <defaults>
</compile_context>

<pallas_src>
import functools

import jax
import jax.numpy as jnp
from jax.experimental import pallas as pl
from jax.experimental.pallas import tpu as pltpu

BN_EPS = 1e-5
LANE = 128
ROW_PAD = 256                          # pad N to a multiple of this
VMEM_BUDGET = 24 * 1024 * 1024         # plan tiles against v7x (smallest VMEM)
VMEM_LIMIT = 32 * 1024 * 1024          # explicit scoped-VMEM limit (v5e default is 16 MiB)


# ------------------------------ tiling helpers ------------------------------ #

def _round_up(x, m):
    return ((x + m - 1) // m) * m


def _choose_row_tile(n_pad):
    """Row tile over the padded node dim (n_pad is a multiple of 256).

    Prefer 256-multiples (full 256x256 MXU rows on v6e/v7x) with an even,
    >=2 tile count so both v7x TensorCores get equal work.
    """
    for cand in (1024, 512, 256):
        if n_pad % cand == 0 and (n_pad // cand) >= 2 and (n_pad // cand) % 2 == 0:
            return cand
    for cand in (1024, 512, 256):
        if n_pad % cand == 0 and (n_pad // cand) >= 2:
            return cand
    return n_pad // 2                  # multiple of 128 (n_pad is a 256-multiple)


def _plan_agg_tiles(n_pad, c_out, out_bytes):
    """Pick (tm, tk) for A_hat @ XW under the per-generation VMEM budget."""
    tm = _choose_row_tile(n_pad)
    fixed = 2 * n_pad * c_out * 2      # resident XW (bf16, double-buffered worst case)
    fixed += tm * c_out * 4            # f32 accumulator scratch
    fixed += 2 * tm * c_out * out_bytes  # double-buffered output tile
    fixed += 2 * c_out * 4             # bias
    tk = 256
    for cand in (n_pad, 4096, 2048, 1024, 512, 256):
        if cand <= n_pad and n_pad % cand == 0 and fixed + 2 * tm * cand * 2 <= VMEM_BUDGET:
            tk = cand
            break
    return tm, tk


# ----------------------------- Pallas kernels ------------------------------ #

def _project_kernel(x_ref, w_ref, o_ref):
    """XW row tile: [tm, c_in_pad] @ [c_in_pad, c_out_pad], f32 accumulation."""
    o_ref[...] = jnp.dot(x_ref[...], w_ref[...],
                         preferred_element_type=jnp.float32).astype(o_ref.dtype)


def _agg_hidden_kernel(a_ref, xw_ref, b_ref, o_ref, acc_ref, *, tk):
    """Hidden layer: relu(A_hat @ XW + b'), K-tiled, XW resident in VMEM."""
    k = pl.program_id(1)
    start = pl.multiple_of(k * tk, 256)
    part = jnp.dot(a_ref[...], xw_ref[pl.ds(start, tk), :],
                   preferred_element_type=jnp.float32)

    @pl.when(k == 0)
    def _():
        acc_ref[...] = part            # init from first dot (no zero-fill + RMW)

    @pl.when(k > 0)
    def _():
        acc_ref[...] += part

    @pl.when(k == pl.num_programs(1) - 1)
    def _():
        # BatchNorm (eval) already folded into W'/b' in the wrapper.
        h = acc_ref[...] + b_ref[...]
        o_ref[...] = jnp.maximum(h, 0.0).astype(o_ref.dtype)


def _agg_final_kernel(a_ref, xw_ref, b_ref, o_ref, acc_ref, *, tk, c_valid):
    """Final layer: log_softmax(A_hat @ XW + b, -1) over the c_valid columns."""
    k = pl.program_id(1)
    start = pl.multiple_of(k * tk, 256)
    part = jnp.dot(a_ref[...], xw_ref[pl.ds(start, tk), :],
                   preferred_element_type=jnp.float32)

    @pl.when(k == 0)
    def _():
        acc_ref[...] = part

    @pl.when(k > 0)
    def _():
        acc_ref[...] += part

    @pl.when(k == pl.num_programs(1) - 1)
    def _():
        h = acc_ref[...] + b_ref[...]
        # Mask the lane-padding columns out of the softmax.
        col = jax.lax.broadcasted_iota(jnp.int32, h.shape, 1)
        h = jnp.where(col < c_valid, h, -jnp.inf)
        m = jnp.max(h, axis=-1, keepdims=True)
        shifted = h - m
        lse = jnp.log(jnp.sum(jnp.exp(shifted), axis=-1, keepdims=True))
        o_ref[...] = (shifted - lse).astype(o_ref.dtype)


# ------------------------------ pallas_call glue ---------------------------- #

def gcn_project(x, w):
    """Hoisted per-layer projection XW = X @ W (computed once per layer)."""
    n, c_in = x.shape
    c_out = w.shape[1]
    tm = _choose_row_tile(n)
    return pl.pallas_call(
        _project_kernel,
        out_shape=jax.ShapeDtypeStruct((n, c_out), jnp.bfloat16),
        grid_spec=pltpu.PrefetchScalarGridSpec(
            num_scalar_prefetch=0,
            grid=(n // tm,),
            in_specs=[
                pl.BlockSpec((tm, c_in), lambda i: (i, 0)),      # X row tile
                pl.BlockSpec((c_in, c_out), lambda i: (0, 0)),   # folded W (resident)
            ],
            out_specs=pl.BlockSpec((tm, c_out), lambda i: (i, 0)),
        ),
        compiler_params=pltpu.CompilerParams(
            dimension_semantics=("parallel",),
            vmem_limit_bytes=VMEM_LIMIT),
    )(x, w)


def gcn_aggregate(a_hat, xw, b, *, final=False, c_valid=None):
    """A_hat @ XW + b with fused epilogue (relu, or masked log_softmax).

    XW is VMEM-resident (constant block index -> single DMA); the K-chunk is
    sliced in-kernel, so A_hat is the only operand streamed per grid step.
    """
    n = a_hat.shape[0]
    c_out = xw.shape[1]
    out_dtype = jnp.float32 if final else jnp.bfloat16
    tm, tk = _plan_agg_tiles(n, c_out, jnp.dtype(out_dtype).itemsize)
    grid = (n // tm, n // tk)

    if final:
        kernel = functools.partial(_agg_final_kernel, tk=tk, c_valid=c_valid)
    else:
        kernel = functools.partial(_agg_hidden_kernel, tk=tk)

    return pl.pallas_call(
        kernel,
        out_shape=jax.ShapeDtypeStruct((n, c_out), out_dtype),
        grid_spec=pltpu.PrefetchScalarGridSpec(
            num_scalar_prefetch=0,
            grid=grid,
            in_specs=[
                pl.BlockSpec((tm, tk), lambda i, k: (i, k)),     # A_hat tile (bf16, streamed)
                pl.BlockSpec((n, c_out), lambda i, k: (0, 0)),   # XW fully resident (bf16)
                pl.BlockSpec((1, c_out), lambda i, k: (0, 0)),   # folded bias (f32)
            ],
            out_specs=pl.BlockSpec((tm, c_out), lambda i, k: (i, 0)),
            scratch_shapes=[pltpu.VMEM((tm, c_out), jnp.float32)],  # f32 accumulator
        ),
        compiler_params=pltpu.CompilerParams(
            dimension_semantics=("parallel", "arbitrary"),
            vmem_limit_bytes=VMEM_LIMIT),
    )(a_hat, xw, b)


# ---------------------------- wrapper-side folding --------------------------- #

def _fold_bn(w, b, gamma, beta, mean, var):
    """Fold eval-mode BatchNorm into the layer weight/bias (per output column)."""
    scale = gamma * jax.lax.rsqrt(var + BN_EPS)          # (1, c_out)
    return w * scale, (b - mean) * scale + beta


def _pad_cols(m, c_pad):
    return m if m.shape[1] == c_pad else jnp.pad(m, ((0, 0), (0, c_pad - m.shape[1])))


def _pad_rows(m, r_pad):
    return m if m.shape[0] == r_pad else jnp.pad(m, ((0, r_pad - m.shape[0]), (0, 0)))


@jax.jit
def gcn_forward(x, a_hat, params):
    """Full GCN forward (eval mode). params is a dict of per-layer tensors."""
    n, c_in = x.shape
    n_pad = _round_up(max(n, ROW_PAD), ROW_PAD)          # zero-pad node dim (inert)
    c_in_pad = _round_up(c_in, LANE)                     # lane-dense first projection

    a_bf16 = _pad_cols(_pad_rows(a_hat, n_pad), n_pad).astype(jnp.bfloat16)
    h = _pad_cols(_pad_rows(x, n_pad), c_in_pad).astype(jnp.bfloat16)

    for layer in params["hidden"]:
        w_f, b_f = _fold_bn(layer["w"], layer["b"], layer["gamma"],
                            layer["beta"], layer["mean"], layer["var"])
        c_out_pad = _round_up(w_f.shape[1], LANE)        # lane-dense activations
        w_f = _pad_cols(_pad_rows(w_f, c_in_pad), c_out_pad).astype(jnp.bfloat16)
        b_f = _pad_cols(b_f, c_out_pad).astype(jnp.float32)
        xw = gcn_project(h, w_f)                         # hoisted: once per layer
        h = gcn_aggregate(a_bf16, xw, b_f)               # relu(A_hat @ XW + b')
        # Dropout: identity in eval mode.
        c_in_pad = c_out_pad

    last = params["last"]
    c_out = last["w"].shape[1]
    c_out_pad = _round_up(c_out, LANE)                   # lane-dense final store
    w_l = _pad_cols(_pad_rows(last["w"], c_in_pad), c_out_pad).astype(jnp.bfloat16)
    b_l = _pad_cols(last["b"], c_out_pad).astype(jnp.float32)
    xw = gcn_project(h, w_l)
    out = gcn_aggregate(a_bf16, xw, b_l, final=True, c_valid=c_out)
    return out[:n, :c_out]


# ------------------------------ parameter setup ----------------------------- #

def make_params(key, in_channels, hidden_channels, out_channels, num_layers):
    dims = ([in_channels] + [hidden_channels] * (num_layers - 1),
            [hidden_channels] * (num_layers - 1) + [out_channels])
    hidden = []
    keys = jax.random.split(key, num_layers + 1)
    for li in range(num_layers - 1):
        c_in, c_out = dims[0][li], dims[1][li]
        kw, kg, kb = jax.random.split(keys[li], 3)
        scale = jnp.sqrt(6.0 / (c_in + c_out))  # glorot-uniform like GCNConv
        hidden.append(dict(
            w=jax.random.uniform(kw, (c_in, c_out), jnp.float32, -scale, scale),
            b=jnp.zeros((1, c_out), jnp.float32),
            gamma=1.0 + 0.1 * jax.random.normal(kg, (1, c_out), jnp.float32),
            beta=0.1 * jax.random.normal(kb, (1, c_out), jnp.float32),
            mean=jnp.zeros((1, c_out), jnp.float32),
            var=jnp.ones((1, c_out), jnp.float32),
        ))
    c_in, c_out = dims[0][-1], dims[1][-1]
    scale = jnp.sqrt(6.0 / (c_in + c_out))
    last = dict(
        w=jax.random.uniform(keys[-2], (c_in, c_out), jnp.float32, -scale, scale),
        b=jnp.zeros((1, c_out), jnp.float32),
    )
    return dict(hidden=hidden, last=last)


def make_normalized_adjacency(key, n):
    """Dense GCN-normalized adjacency: D^{-1/2} (A + I) D^{-1/2}."""
    probs = jax.random.uniform(key, (n, n))
    a = (probs < 0.05).astype(jnp.float32)
    a = jnp.maximum(a, a.T)                          # symmetric
    a = a + jnp.eye(n, dtype=jnp.float32)            # self loops
    a = jnp.minimum(a, 1.0)
    deg = jnp.sum(a, axis=1)
    d_inv_sqrt = jax.lax.rsqrt(deg)
    return a * d_inv_sqrt[:, None] * d_inv_sqrt[None, :]


# ---------------------------------- main ------------------------------------ #

if __name__ == "__main__":
    N = 128              # number of graph nodes
    IN_CH = 16
    HIDDEN_CH = 32
    OUT_CH = 8
    NUM_LAYERS = 3
    # dropout = 0.5  (inert in eval mode)

    key = jax.random.PRNGKey(0)
    kx, ka, kp = jax.random.split(key, 3)

    x = jax.random.normal(kx, (N, IN_CH), jnp.float32)     # layout: [N, C]
    a_hat = make_normalized_adjacency(ka, N)                # layout: [N, N]
    params = make_params(kp, IN_CH, HIDDEN_CH, OUT_CH, NUM_LAYERS)

    out = gcn_forward(x, a_hat, params)
    out = jax.block_until_ready(out)

    assert out.shape == (N, OUT_CH), out.shape
    # log_softmax rows must (log-)sum to ~0.
    row_sums = jnp.sum(jnp.exp(out), axis=-1)
    assert bool(jnp.all(jnp.abs(row_sums - 1.0) < 1e-4)), row_sums
    assert bool(jnp.all(jnp.isfinite(out))), "non-finite log-probs"

    print("KERNEL_OK")
</pallas_src>

<mosaic_0001>
module attributes {stable_mosaic.version = 11 : i64} {
  func.func @_project_kernel(%arg0: i32, %arg1: memref<128x128xbf16, #tpu.memory_space<vmem>>, %arg2: memref<128x128xbf16, #tpu.memory_space<vmem>>, %arg3: memref<128x128xbf16, #tpu.memory_space<vmem>>) attributes {dimension_semantics = [#tpu.dimension_semantics<parallel>], iteration_bounds = array<i64: 2>, scalar_prefetch = 0 : i64, scratch_operands = 0 : i64, tpu.core_type = #tpu.core_type<tc>, window_params = [{transform_indices = @transform_0, window_bounds = array<i64: 128, 128>}, {pipeline_mode = #tpu.pipeline_mode<synchronous>, transform_indices = @transform_1, window_bounds = array<i64: 128, 128>}, {transform_indices = @transform_2, window_bounds = array<i64: 128, 128>}]} {
    %c0 = arith.constant 0 : index
    %c0_0 = arith.constant 0 : index
    %0 = vector.load %arg1[%c0, %c0_0] : memref<128x128xbf16, #tpu.memory_space<vmem>>, vector<128x128xbf16>
    %c0_1 = arith.constant 0 : index
    %c0_2 = arith.constant 0 : index
    %1 = vector.load %arg2[%c0_1, %c0_2] : memref<128x128xbf16, #tpu.memory_space<vmem>>, vector<128x128xbf16>
    %cst = arith.constant dense<0.000000e+00> : vector<128x128xf32>
    %2 = tpu.matmul %0, %1, %cst {dimension_numbers = #tpu.dot_dimension_numbers<[1], [0], [0], [1], [0, 0, 1, 1], [], []>} : vector<128x128xbf16>, vector<128x128xbf16>, vector<128x128xf32> -> vector<128x128xf32>
    %3 = arith.truncf %2 : vector<128x128xf32> to vector<128x128xbf16>
    %c0_3 = arith.constant 0 : index
    %c0_4 = arith.constant 0 : index
    %4 = vector.load %arg3[%c0_3, %c0_4] : memref<128x128xbf16, #tpu.memory_space<vmem>>, vector<128x128xbf16>
    tpu.vector_store %arg3[%c0_3, %c0_4], %3 {strides = array<i32>} : memref<128x128xbf16, #tpu.memory_space<vmem>>, vector<128x128xbf16>,
    return
  }
  func.func @transform_0(%arg0: i32) -> (i32, i32) {
    %c0_i32 = arith.constant 0 : i32
    %c0_i32_0 = arith.constant 0 : i32
    return %arg0, %c0_i32 : i32, i32
  }
  func.func @transform_1(%arg0: i32) -> (i32, i32) {
    %c0_i32 = arith.constant 0 : i32
    %c0_i32_0 = arith.constant 0 : i32
    %c0_i32_1 = arith.constant 0 : i32
    return %c0_i32, %c0_i32_0 : i32, i32
  }
  func.func @transform_2(%arg0: i32) -> (i32, i32) {
    %c0_i32 = arith.constant 0 : i32
    %c0_i32_0 = arith.constant 0 : i32
    return %arg0, %c0_i32 : i32, i32
  }
}

module attributes {stable_mosaic.version = 11 : i64} {
  func.func @_agg_hidden_kernel(%arg0: i32, %arg1: i32, %arg2: memref<128x256xbf16, #tpu.memory_space<vmem>>, %arg3: memref<256x128xbf16, #tpu.memory_space<vmem>>, %arg4: memref<1x128xf32, #tpu.memory_space<vmem>>, %arg5: memref<128x128xbf16, #tpu.memory_space<vmem>>, %arg6: memref<128x128xf32, #tpu.memory_space<vmem>>) attributes {dimension_semantics = [#tpu.dimension_semantics<parallel>, #tpu.dimension_semantics<arbitrary>], iteration_bounds = array<i64: 2, 1>, scalar_prefetch = 0 : i64, scratch_operands = 1 : i64, tpu.core_type = #tpu.core_type<tc>, window_params = [{transform_indices = @transform_0, window_bounds = array<i64: 128, 256>}, {pipeline_mode = #tpu.pipeline_mode<synchronous>, transform_indices = @transform_1, window_bounds = array<i64: 256, 128>}, {pipeline_mode = #tpu.pipeline_mode<synchronous>, transform_indices = @transform_2, window_bounds = array<i64: 1, 128>}, {transform_indices = @transform_3, window_bounds = array<i64: 128, 128>}]} {
    %c256_i32 = arith.constant 256 : i32
    %0 = arith.muli %arg1, %c256_i32 : i32
    %1 = tpu.assume_multiple %0, 256 : i32
    %c0 = arith.constant 0 : index
    %c0_0 = arith.constant 0 : index
    %2 = vector.load %arg2[%c0, %c0_0] : memref<128x256xbf16, #tpu.memory_space<vmem>>, vector<128x256xbf16>
    %3 = arith.index_cast %1 : i32 to index
    %c0_1 = arith.constant 0 : index
    %4 = vector.load %arg3[%3, %c0_1] : memref<256x128xbf16, #tpu.memory_space<vmem>>, vector<256x128xbf16>
    %cst = arith.constant dense<0.000000e+00> : vector<128x128xf32>
    %5 = tpu.matmul %2, %4, %cst {dimension_numbers = #tpu.dot_dimension_numbers<[1], [0], [0], [1], [0, 0, 1, 1], [], []>} : vector<128x256xbf16>, vector<256x128xbf16>, vector<128x128xf32> -> vector<128x128xf32>
    %c0_i32 = arith.constant 0 : i32
    %6 = arith.cmpi eq, %arg1, %c0_i32 : i32
    %7 = arith.extui %6 : i1 to i32
    %c0_i32_2 = arith.constant 0 : i32
    %8 = arith.cmpi ne, %7, %c0_i32_2 : i32
    scf.if %8 {
      %c0_7 = arith.constant 0 : index
      %c0_8 = arith.constant 0 : index
      %15 = vector.load %arg6[%c0_7, %c0_8] : memref<128x128xf32, #tpu.memory_space<vmem>>, vector<128x128xf32>
      tpu.vector_store %arg6[%c0_7, %c0_8], %5 {strides = array<i32>} : memref<128x128xf32, #tpu.memory_space<vmem>>, vector<128x128xf32>,
    } else {
    }
    %c0_i32_3 = arith.constant 0 : i32
    %9 = arith.cmpi sgt, %arg1, %c0_i32_3 : i32
    %10 = arith.extui %9 : i1 to i32
    %c0_i32_4 = arith.constant 0 : i32
    %11 = arith.cmpi ne, %10, %c0_i32_4 : i32
    scf.if %11 {
      %c0_7 = arith.constant 0 : index
      %c0_8 = arith.constant 0 : index
      %15 = vector.load %arg6[%c0_7, %c0_8] : memref<128x128xf32, #tpu.memory_space<vmem>>, vector<128x128xf32>
      %16 = arith.addf %15, %5 : vector<128x128xf32>
      %c0_9 = arith.constant 0 : index
      %c0_10 = arith.constant 0 : index
      %17 = vector.load %arg6[%c0_9, %c0_10] : memref<128x128xf32, #tpu.memory_space<vmem>>, vector<128x128xf32>
      tpu.vector_store %arg6[%c0_9, %c0_10], %16 {strides = array<i32>} : memref<128x128xf32, #tpu.memory_space<vmem>>, vector<128x128xf32>,
    } else {
    }
    %c0_i32_5 = arith.constant 0 : i32
    %12 = arith.cmpi eq, %arg1, %c0_i32_5 : i32
    %13 = arith.extui %12 : i1 to i32
    %c0_i32_6 = arith.constant 0 : i32
    %14 = arith.cmpi ne, %13, %c0_i32_6 : i32
    scf.if %14 {
      %c0_7 = arith.constant 0 : index
      %c0_8 = arith.constant 0 : index
      %15 = vector.load %arg6[%c0_7, %c0_8] : memref<128x128xf32, #tpu.memory_space<vmem>>, vector<128x128xf32>
      %c0_9 = arith.constant 0 : index
      %c0_10 = arith.constant 0 : index
      %16 = vector.load %arg4[%c0_9, %c0_10] : memref<1x128xf32, #tpu.memory_space<vmem>>, vector<1x128xf32>
      %17 = vector.broadcast %16 : vector<1x128xf32> to vector<128x128xf32>
      %18 = arith.addf %15, %17 : vector<128x128xf32>
      %cst_11 = arith.constant 0.000000e+00 : f32
      %19 = vector.broadcast %cst_11 : f32 to vector<128x128xf32>
      %20 = arith.maximumf %18, %19 : vector<128x128xf32>
      %21 = arith.truncf %20 : vector<128x128xf32> to vector<128x128xbf16>
      %c0_12 = arith.constant 0 : index
      %c0_13 = arith.constant 0 : index
      %22 = vector.load %arg5[%c0_12, %c0_13] : memref<128x128xbf16, #tpu.memory_space<vmem>>, vector<128x128xbf16>
      tpu.vector_store %arg5[%c0_12, %c0_13], %21 {strides = array<i32>} : memref<128x128xbf16, #tpu.memory_space<vmem>>, vector<128x128xbf16>,
    } else {
    }
    return
  }
  func.func @transform_0(%arg0: i32, %arg1: i32) -> (i32, i32) {
    %c0_i32 = arith.constant 0 : i32
    return %arg0, %arg1 : i32, i32
  }
  func.func @transform_1(%arg0: i32, %arg1: i32) -> (i32, i32) {
    %c0_i32 = arith.constant 0 : i32
    %c0_i32_0 = arith.constant 0 : i32
    %c0_i32_1 = arith.constant 0 : i32
    return %c0_i32, %c0_i32_0 : i32, i32
  }
  func.func @transform_2(%arg0: i32, %arg1: i32) -> (i32, i32) {
    %c0_i32 = arith.constant 0 : i32
    %c0_i32_0 = arith.constant 0 : i32
    %c0_i32_1 = arith.constant 0 : i32
    return %c0_i32, %c0_i32_0 : i32, i32
  }
  func.func @transform_3(%arg0: i32, %arg1: i32) -> (i32, i32) {
    %c0_i32 = arith.constant 0 : i32
    %c0_i32_0 = arith.constant 0 : i32
    return %arg0, %c0_i32 : i32, i32
  }
}

module attributes {stable_mosaic.version = 11 : i64} {
  func.func @_agg_final_kernel(%arg0: i32, %arg1: i32, %arg2: memref<128x256xbf16, #tpu.memory_space<vmem>>, %arg3: memref<256x128xbf16, #tpu.memory_space<vmem>>, %arg4: memref<1x128xf32, #tpu.memory_space<vmem>>, %arg5: memref<128x128xf32, #tpu.memory_space<vmem>>, %arg6: memref<128x128xf32, #tpu.memory_space<vmem>>) attributes {dimension_semantics = [#tpu.dimension_semantics<parallel>, #tpu.dimension_semantics<arbitrary>], iteration_bounds = array<i64: 2, 1>, scalar_prefetch = 0 : i64, scratch_operands = 1 : i64, tpu.core_type = #tpu.core_type<tc>, window_params = [{transform_indices = @transform_0, window_bounds = array<i64: 128, 256>}, {pipeline_mode = #tpu.pipeline_mode<synchronous>, transform_indices = @transform_1, window_bounds = array<i64: 256, 128>}, {pipeline_mode = #tpu.pipeline_mode<synchronous>, transform_indices = @transform_2, window_bounds = array<i64: 1, 128>}, {transform_indices = @transform_3, window_bounds = array<i64: 128, 128>}]} {
    %c256_i32 = arith.constant 256 : i32
    %0 = arith.muli %arg1, %c256_i32 : i32
    %1 = tpu.assume_multiple %0, 256 : i32
    %c0 = arith.constant 0 : index
    %c0_0 = arith.constant 0 : index
    %2 = vector.load %arg2[%c0, %c0_0] : memref<128x256xbf16, #tpu.memory_space<vmem>>, vector<128x256xbf16>
    %3 = arith.index_cast %1 : i32 to index
    %c0_1 = arith.constant 0 : index
    %4 = vector.load %arg3[%3, %c0_1] : memref<256x128xbf16, #tpu.memory_space<vmem>>, vector<256x128xbf16>
    %cst = arith.constant dense<0.000000e+00> : vector<128x128xf32>
    %5 = tpu.matmul %2, %4, %cst {dimension_numbers = #tpu.dot_dimension_numbers<[1], [0], [0], [1], [0, 0, 1, 1], [], []>} : vector<128x256xbf16>, vector<256x128xbf16>, vector<128x128xf32> -> vector<128x128xf32>
    %c0_i32 = arith.constant 0 : i32
    %6 = arith.cmpi eq, %arg1, %c0_i32 : i32
    %7 = arith.extui %6 : i1 to i32
    %c0_i32_2 = arith.constant 0 : i32
    %8 = arith.cmpi ne, %7, %c0_i32_2 : i32
    scf.if %8 {
      %c0_7 = arith.constant 0 : index
      %c0_8 = arith.constant 0 : index
      %15 = vector.load %arg6[%c0_7, %c0_8] : memref<128x128xf32, #tpu.memory_space<vmem>>, vector<128x128xf32>
      tpu.vector_store %arg6[%c0_7, %c0_8], %5 {strides = array<i32>} : memref<128x128xf32, #tpu.memory_space<vmem>>, vector<128x128xf32>,
    } else {
    }
    %c0_i32_3 = arith.constant 0 : i32
    %9 = arith.cmpi sgt, %arg1, %c0_i32_3 : i32
    %10 = arith.extui %9 : i1 to i32
    %c0_i32_4 = arith.constant 0 : i32
    %11 = arith.cmpi ne, %10, %c0_i32_4 : i32
    scf.if %11 {
      %c0_7 = arith.constant 0 : index
      %c0_8 = arith.constant 0 : index
      %15 = vector.load %arg6[%c0_7, %c0_8] : memref<128x128xf32, #tpu.memory_space<vmem>>, vector<128x128xf32>
      %16 = arith.addf %15, %5 : vector<128x128xf32>
      %c0_9 = arith.constant 0 : index
      %c0_10 = arith.constant 0 : index
      %17 = vector.load %arg6[%c0_9, %c0_10] : memref<128x128xf32, #tpu.memory_space<vmem>>, vector<128x128xf32>
      tpu.vector_store %arg6[%c0_9, %c0_10], %16 {strides = array<i32>} : memref<128x128xf32, #tpu.memory_space<vmem>>, vector<128x128xf32>,
    } else {
    }
    %c0_i32_5 = arith.constant 0 : i32
    %12 = arith.cmpi eq, %arg1, %c0_i32_5 : i32
    %13 = arith.extui %12 : i1 to i32
    %c0_i32_6 = arith.constant 0 : i32
    %14 = arith.cmpi ne, %13, %c0_i32_6 : i32
    scf.if %14 {
      %c0_7 = arith.constant 0 : index
      %c0_8 = arith.constant 0 : index
      %15 = vector.load %arg6[%c0_7, %c0_8] : memref<128x128xf32, #tpu.memory_space<vmem>>, vector<128x128xf32>
      %c0_9 = arith.constant 0 : index
      %c0_10 = arith.constant 0 : index
      %16 = vector.load %arg4[%c0_9, %c0_10] : memref<1x128xf32, #tpu.memory_space<vmem>>, vector<1x128xf32>
      %17 = vector.broadcast %16 : vector<1x128xf32> to vector<128x128xf32>
      %18 = arith.addf %15, %17 : vector<128x128xf32>
      %19 = tpu.iota {dimensions = array<i32: 1>} : vector<128x128xi32>
      %c8_i32 = arith.constant 8 : i32
      %20 = vector.broadcast %c8_i32 : i32 to vector<128x128xi32>
      %21 = arith.cmpi slt, %19, %20 : vector<128x128xi32>
      %cst_11 = arith.constant 0xFF800000 : f32
      %22 = vector.broadcast %cst_11 : f32 to vector<128x128xf32>
      %23 = arith.select %21, %18, %22 : vector<128x128xi1>, vector<128x128xf32>
      %cst_12 = arith.constant dense<0xFF800000> : vector<128xf32>
      %24 = vector.multi_reduction <maximumf>, %23, %cst_12 [1] : vector<128x128xf32> to vector<128xf32>
      %25 = vector.shape_cast %24 : vector<128xf32> to vector<128x1xf32>
      %26 = vector.broadcast %25 : vector<128x1xf32> to vector<128x128xf32>
      %27 = arith.subf %23, %26 : vector<128x128xf32>
      %28 = math.exp %27 : vector<128x128xf32>
      %cst_13 = arith.constant dense<0.000000e+00> : vector<128xf32>
      %29 = vector.multi_reduction <add>, %28, %cst_13 [1] : vector<128x128xf32> to vector<128xf32>
      %30 = vector.shape_cast %29 : vector<128xf32> to vector<128x1xf32>
      %31 = math.log %30 : vector<128x1xf32>
      %32 = vector.broadcast %31 : vector<128x1xf32> to vector<128x128xf32>
      %33 = arith.subf %27, %32 : vector<128x128xf32>
      %c0_14 = arith.constant 0 : index
      %c0_15 = arith.constant 0 : index
      %34 = vector.load %arg5[%c0_14, %c0_15] : memref<128x128xf32, #tpu.memory_space<vmem>>, vector<128x128xf32>
      tpu.vector_store %arg5[%c0_14, %c0_15], %33 {strides = array<i32>} : memref<128x128xf32, #tpu.memory_space<vmem>>, vector<128x128xf32>,
    } else {
    }
    return
  }
  func.func @transform_0(%arg0: i32, %arg1: i32) -> (i32, i32) {
    %c0_i32 = arith.constant 0 : i32
    return %arg0, %arg1 : i32, i32
  }
  func.func @transform_1(%arg0: i32, %arg1: i32) -> (i32, i32) {
    %c0_i32 = arith.constant 0 : i32
    %c0_i32_0 = arith.constant 0 : i32
    %c0_i32_1 = arith.constant 0 : i32
    return %c0_i32, %c0_i32_0 : i32, i32
  }
  func.func @transform_2(%arg0: i32, %arg1: i32) -> (i32, i32) {
    %c0_i32 = arith.constant 0 : i32
    %c0_i32_0 = arith.constant 0 : i32
    %c0_i32_1 = arith.constant 0 : i32
    return %c0_i32, %c0_i32_0 : i32, i32
  }
  func.func @transform_3(%arg0: i32, %arg1: i32) -> (i32, i32) {
    %c0_i32 = arith.constant 0 : i32
    %c0_i32_0 = arith.constant 0 : i32
    return %arg0, %c0_i32 : i32, i32
  }
}

</mosaic_0001>

<llo_original>
// kernel: gcn_forward.6
$region0: #{gcn_forward.6}
  #allocation0 [shape = 'u32[]', space=smem, size = 0x4, offset = 0x4, fixed_abs, tag = 'smem constant byte address 0x4 - core index']
  #allocation1 [shape = 'u32[144,128]{1,0:T(1,128)}', space=vmem, size = 0x12000, scoped, tag = 'internal scratch']
  %s0 = inlined_call_operand.vmem [shape: bf16[256,128], index: 0, kind: input, shape index: {}]
  %s1 = inlined_call_operand.vmem [shape: bf16[128,128], index: 1, kind: input, shape index: {}]
  %s2 = inlined_call_operand.vmem [shape: bf16[256,128], index: 2, kind: output, shape index: {}]
  %s3 = sld [smem:[#allocation0]]
  $region41: #{gcn_forward.6} parent=0
    _
  %s5 = ssub.s32 1, %s3
  %s6 = scalar_select 0, %s5, %s3
  loop: start=0, step=1, limit=4
  $region2: #{gcn_forward.6} parent=0 // loop_pre_header
    _
  $region3: #{gcn_forward.6} parent=0 // loop_header
    %s8 = sphi 0, %s12
    %p9 = scmp.ge.s32.totalorder %s8, 4
    %s18 = sphi 0, %s20
    %s21 = sphi 0, %s18
    %s22 = sphi 0, %s21
    %s38 = sphi 0, %s22
    %s42 = sphi 0, %s42
    %s44 = sphi 0, %s42
    %s45 = sphi 0, %s44
    %s59 = sphi 0, %s45
    %s65 = sphi 0, %s67
    %s68 = sphi 0, %s65
    %s69 = sphi 0, %s68
    %s85 = sphi 0, %s69
  $region4: #{gcn_forward.6} parent=0 // loop_header_branch
    %11 = sbr.rel (%p9) target = $region8
  $region5: #{gcn_forward.6} parent=0 // loop_body
    %s13 = ssub.s32 %s8, 1
    %s14 = ssub.s32 %s8, 2
    %s15 = sadd.s32 %s8, 1
    %s16 = ssub.s32 %s8, %s15
    %p17 = scmp.eq.s32.totalorder %s16, 0
    %s19 = sadd.s32 %s18, 1
    %s20 = scalar_select %p17, %s18, %s19
    %p23 = pneg %p17
    %p24 = scmp.eq.s32.totalorder %s8, 1
    %p25 = por %p23, %p24
    %p26 = scmp.ne.s32.totalorder %s18, %s21
    %p27 = scmp.eq.s32.totalorder %s8, 0
    %p28 = por %p26, %p27
    %p29 = scmp.ne.s32.totalorder %s18, %s21
    %p30 = scmp.eq.s32.totalorder %s13, 1
    %p31 = por %p29, %p30
    %p32 = scmp.ne.s32.totalorder %s21, %s22
    %p33 = scmp.eq.s32.totalorder %s13, 0
    %p34 = por %p32, %p33
    %p35 = scmp.ne.s32.totalorder %s21, %s22
    %p36 = scmp.eq.s32.totalorder %s14, 1
    %p37 = por %p35, %p36
    %p39 = scmp.ne.s32.totalorder %s22, %s38
    %p40 = scmp.eq.s32.totalorder %s14, 0
    %p41 = por %p39, %p40
    %s43 = sadd.s32 %s42, 1
    %p46 = scmp.eq.s32.totalorder %s8, 1
    %p47 = scmp.ne.s32.totalorder %s42, %s44
    %p48 = scmp.eq.s32.totalorder %s8, 0
    %p49 = por %p47, %p48
    %p50 = scmp.ne.s32.totalorder %s42, %s44
    %p51 = scmp.eq.s32.totalorder %s13, 1
    %p52 = por %p50, %p51
    %p53 = scmp.ne.s32.totalorder %s44, %s45
    %p54 = scmp.eq.s32.totalorder %s13, 0
    %p55 = por %p53, %p54
    %p56 = scmp.ne.s32.totalorder %s44, %s45
    %p57 = scmp.eq.s32.totalorder %s14, 1
    %p58 = por %p56, %p57
    %p60 = scmp.ne.s32.totalorder %s45, %s59
    %p61 = scmp.eq.s32.totalorder %s14, 0
    %p62 = por %p60, %p61
    %s63 = ssub.s32 %s8, %s15
    %p64 = scmp.eq.s32.totalorder %s63, 0
    %s66 = sadd.s32 %s65, 1
    %s67 = scalar_select %p64, %s65, %s66
    %p70 = pneg %p64
    %p71 = scmp.eq.s32.totalorder %s8, 1
    %p72 = por %p70, %p71
    %p73 = scmp.ne.s32.totalorder %s65, %s68
    %p74 = scmp.eq.s32.totalorder %s8, 0
    %p75 = por %p73, %p74
    %p76 = scmp.ne.s32.totalorder %s65, %s68
    %p77 = scmp.eq.s32.totalorder %s13, 1
    %p78 = por %p76, %p77
    %p79 = scmp.ne.s32.totalorder %s68, %s69
    %p80 = scmp.eq.s32.totalorder %s13, 0
    %p81 = por %p79, %p80
    %p82 = scmp.ne.s32.totalorder %s68, %s69
    %p83 = scmp.eq.s32.totalorder %s14, 1
    %p84 = por %p82, %p83
    %p86 = scmp.ne.s32.totalorder %s69, %s85
    %p87 = scmp.eq.s32.totalorder %s14, 0
    %p88 = por %p86, %p87
    %p89 = scmp.le.s32.totalorder 1, %s8
    %p90 = scmp.lt.s32.totalorder %s8, 3
    %p91 = pnand %p89, %p90
    %p92 = pneg %p91
    // Predicated region
    $region9: #{gcn_forward.6} parent=5 // pred_check
      _
    $region10: #{gcn_forward.6} parent=5 // pred_check_branch
      %94 = sbr.rel (%p91) target = $region12
    $region11: #{gcn_forward.6} parent=5 // pred_region
      %s95 = ssub.s32 %s8, 1
      // Predicated region
      $region13: #{gcn_forward.6} parent=11 // pred_check
        %p96 = pneg %p55
      $region14: #{gcn_forward.6} parent=11 // pred_check_branch
        %98 = sbr.rel (%p96) target = $region16
      $region15: #{gcn_forward.6} parent=11 // pred_region
        _
      $region16: #{gcn_forward.6} parent=11 // pred_fallthru
        _
    $region12: #{gcn_forward.6} parent=5 // pred_fallthru
      _
    %p99 = scmp.lt.s32.totalorder %s8, 2
    // Predicated region
    $region17: #{gcn_forward.6} parent=5 // pred_check
      %p100 = pneg %p99
    $region18: #{gcn_forward.6} parent=5 // pred_check_branch
      %102 = sbr.rel (%p100) target = $region20
    $region19: #{gcn_forward.6} parent=5 // pred_region
      // Predicated region
      $region21: #{gcn_forward.6} parent=19 // pred_check
        %p103 = pneg %p28
      $region22: #{gcn_forward.6} parent=19 // pred_check_branch
        %105 = sbr.rel (%p103) target = $region24
      $region23: #{gcn_forward.6} parent=19 // pred_region
        %s106 = smul.u32 16, %s8
        %p107 = scmp.lt.s32.totalorder %s106, 31
        %s108 = scalar_select %p107, %s106, 31
        %s109 = smul.addr %s108, 4
        %s110 = scalar_lea.vmem %s0, %s109
        %s111 = smul.u32 16, %s8
      $region24: #{gcn_forward.6} parent=19 // pred_fallthru
        _
    $region20: #{gcn_forward.6} parent=5 // pred_fallthru
      _
    %p112 = scmp.le.s32.totalorder 1, %s8
    %p113 = scmp.lt.s32.totalorder %s8, 3
    %p114 = pnand %p112, %p113
    %p115 = pneg %p114
    // Predicated region
    $region25: #{gcn_forward.6} parent=5 // pred_check
      _
    $region26: #{gcn_forward.6} parent=5 // pred_check_branch
      %117 = sbr.rel (%p114) target = $region28
    $region27: #{gcn_forward.6} parent=5 // pred_region
      %s118 = ssub.s32 %s8, 1
      %s119 = smul.u32 16, %s13
      %p120 = scmp.lt.s32.totalorder %s119, 31
      %s121 = scalar_select %p120, %s119, 31
      %s122 = smul.addr %s121, 4
      %s123 = scalar_lea.vmem %s0, %s122
      %p124 = pneg %p34
      %p125 = pneg %p31
      %p126 = pneg %p55
      %p127 = pneg %p52
      %p128 = pneg %p81
      %p129 = pneg %p78
      %s130 = smul.u32 16, %s13
      %p131 = scmp.lt.s32.totalorder %s130, 31
      %s132 = scalar_select %p131, %s130, 31
      %s133 = smul.addr %s132, 4
      %s134 = scalar_lea.vmem %s2, %s133
      %s135 = smul.u32 16, %s13
      %p136 = scmp.lt.s32.totalorder %s135, 31
      %s137 = scalar_select %p136, %s135, 31
      %s138 = smul.addr %s137, 4
      %s139 = scalar_lea.vmem %s0, %s138
      %s140 = smul.u32 16, %s13
      %s141 = smul.u32 16, %s13
      %p142 = scmp.lt.s32.totalorder %s141, 31
      %s143 = scalar_select %p142, %s141, 31
      %s144 = smul.addr %s143, 4
      %s145 = scalar_lea.vmem %s2, %s144
      %s146 = smul.u32 16, %s13
      %v148 = vld [vmem:[%s139] sm:$0xf]
      %v149 = vld [vmem:[%s139 + $0x4] sm:$0xf]
      %v150 = vld [vmem:[%s139 + $0x8] sm:$0xf]
      %v151 = vld [vmem:[%s139 + $0xc] sm:$0xf]
      %v152 = vld [vmem:[%s139 + $0x10] sm:$0xf]
      %v153 = vld [vmem:[%s139 + $0x14] sm:$0xf]
      %v154 = vld [vmem:[%s139 + $0x18] sm:$0xf]
      %v155 = vld [vmem:[%s139 + $0x1c] sm:$0xf]
      %v156 = vld [vmem:[%s139 + $0x20] sm:$0xf]
      %v157 = vld [vmem:[%s139 + $0x24] sm:$0xf]
      %v158 = vld [vmem:[%s139 + $0x28] sm:$0xf]
      %v159 = vld [vmem:[%s139 + $0x2c] sm:$0xf]
      %v160 = vld [vmem:[%s139 + $0x30] sm:$0xf]
      %v161 = vld [vmem:[%s139 + $0x34] sm:$0xf]
      %v162 = vld [vmem:[%s139 + $0x38] sm:$0xf]
      %v163 = vld [vmem:[%s139 + $0x3c] sm:$0xf]
      %v164 = vld [vmem:[%s1] sm:$0xf]
      %v165 = vld [vmem:[%s1 + $0x4] sm:$0xf]
      %v166 = vld [vmem:[%s1 + $0x8] sm:$0xf]
      %v167 = vld [vmem:[%s1 + $0xc] sm:$0xf]
      %v168 = vld [vmem:[%s1 + $0x10] sm:$0xf]
      %v169 = vld [vmem:[%s1 + $0x14] sm:$0xf]
      %v170 = vld [vmem:[%s1 + $0x18] sm:$0xf]
      %v171 = vld [vmem:[%s1 + $0x1c] sm:$0xf]
      %v172 = vld [vmem:[%s1 + $0x20] sm:$0xf]
      %v173 = vld [vmem:[%s1 + $0x24] sm:$0xf]
      %v174 = vld [vmem:[%s1 + $0x28] sm:$0xf]
      %v175 = vld [vmem:[%s1 + $0x2c] sm:$0xf]
      %v176 = vld [vmem:[%s1 + $0x30] sm:$0xf]
      %v177 = vld [vmem:[%s1 + $0x34] sm:$0xf]
      %v178 = vld [vmem:[%s1 + $0x38] sm:$0xf]
      %v179 = vld [vmem:[%s1 + $0x3c] sm:$0xf]
      %v196 = vunpack.c.l.b16 %v148
      %v197 = vunpack.c.l.b16 %v149
      %v198 = vunpack.c.l.b16 %v150
      %v199 = vunpack.c.l.b16 %v151
      %v200 = vunpack.c.l.b16 %v152
      %v201 = vunpack.c.l.b16 %v153
      %v202 = vunpack.c.l.b16 %v154
      %v203 = vunpack.c.l.b16 %v155
      %v204 = vunpack.c.l.b16 %v156
      %v205 = vunpack.c.l.b16 %v157
      %v206 = vunpack.c.l.b16 %v158
      %v207 = vunpack.c.l.b16 %v159
      %v208 = vunpack.c.l.b16 %v160
      %v209 = vunpack.c.l.b16 %v161
      %v210 = vunpack.c.l.b16 %v162
      %v211 = vunpack.c.l.b16 %v163
      %v212 = vpack.c.b16 %v197, %v196
      %v213 = vpack.c.b16 %v199, %v198
      %v214 = vpack.c.b16 %v201, %v200
      %v215 = vpack.c.b16 %v203, %v202
      %v216 = vpack.c.b16 %v205, %v204
      %v217 = vpack.c.b16 %v207, %v206
      %v218 = vpack.c.b16 %v209, %v208
      %v219 = vpack.c.b16 %v211, %v210
      %v244 = vunpack.c.l.b16 %v164
      %v245 = vunpack.c.l.b16 %v165
      %v246 = vunpack.c.l.b16 %v166
      %v247 = vunpack.c.l.b16 %v167
      %v248 = vunpack.c.l.b16 %v168
      %v249 = vunpack.c.l.b16 %v169
      %v250 = vunpack.c.l.b16 %v170
      %v251 = vunpack.c.l.b16 %v171
      %v252 = vunpack.c.l.b16 %v172
      %v253 = vunpack.c.l.b16 %v173
      %v254 = vunpack.c.l.b16 %v174
      %v255 = vunpack.c.l.b16 %v175
      %v256 = vunpack.c.l.b16 %v176
      %v257 = vunpack.c.l.b16 %v177
      %v258 = vunpack.c.l.b16 %v178
      %v259 = vunpack.c.l.b16 %v179
      %v260 = vpack.c.b16 %v245, %v244
      %v261 = vpack.c.b16 %v247, %v246
      %v262 = vpack.c.b16 %v249, %v248
      %v263 = vpack.c.b16 %v251, %v250
      %v264 = vpack.c.b16 %v253, %v252
      %v265 = vpack.c.b16 %v255, %v254
      %v266 = vpack.c.b16 %v257, %v256
      %v267 = vpack.c.b16 %v259, %v258
      %276 = vmatprep.subr.bf16.mxu0 0
      %277 = vmatpush1.bf16.msra.mxu0 %v260
      %278 = vmatprep.subr.bf16.mxu0 0
      %279 = vmatpush1.bf16.msra.mxu0 %v261
      %280 = vmatprep.subr.bf16.mxu0 0
      %281 = vmatpush1.bf16.msra.mxu0 %v262
      %282 = vmatprep.subr.bf16.mxu0 0
      %283 = vmatpush1.bf16.msra.mxu0 %v263
      %284 = vmatprep.subr.bf16.mxu0 0
      %285 = vmatpush1.bf16.msra.mxu0 %v264
      %286 = vmatprep.subr.bf16.mxu0 0
      %287 = vmatpush1.bf16.msra.mxu0 %v265
      %288 = vmatprep.subr.bf16.mxu0 0
      %289 = vmatpush1.bf16.msra.mxu0 %v266
      %290 = vmatprep.subr.bf16.mxu0 0
      %291 = vmatpush1.bf16.msra.mxu0 %v267
      %292 = vmatprep.subr.bf16.mxu0 0
      %293 = vmatpush1.bf16.msra.mxu0 0
      %294 = vmatprep.subr.bf16.mxu0 0
      %295 = vmatpush1.bf16.msra.mxu0 0
      %296 = vmatprep.subr.bf16.mxu0 0
      %297 = vmatpush1.bf16.msra.mxu0 0
      %298 = vmatprep.subr.bf16.mxu0 0
      %299 = vmatpush1.bf16.msra.mxu0 0
      %300 = vmatprep.subr.bf16.mxu0 0
      %301 = vmatpush1.bf16.msra.mxu0 0
      %302 = vmatprep.subr.bf16.mxu0 0
      %303 = vmatpush1.bf16.msra.mxu0 0
      %304 = vmatprep.subr.bf16.mxu0 0
      %305 = vmatpush1.bf16.msra.mxu0 0
      %306 = vmatprep.subr.bf16.mxu0 0
      %307 = vmatpush1.bf16.msra.mxu0 0
      %308 = vmatprep.mubr.bf16.mxu0 0
      %309 = vmatmul.mubr.bf16.gmra.mrb[0].mxu0 %v212
      %v310 = vpop.f32.mrb[0].mxu0
      %v311 = vadd.f32 0.0, %v310
      %v312 = vpop.f32.mrb[0].mxu0
      %v313 = vpop.f32.mrb[0].mxu0
      %v314 = vadd.f32 0.0, %v313
      %v315 = vpop.f32.mrb[0].mxu0
      %316 = vmatprep.mubr.bf16.mxu0 0
      %317 = vmatmul.mubr.bf16.gmra.mrb[0].mxu0 %v213
      %v318 = vpop.f32.mrb[0].mxu0
      %v319 = vadd.f32 0.0, %v318
      %v320 = vpop.f32.mrb[0].mxu0
      %v321 = vpop.f32.mrb[0].mxu0
      %v322 = vadd.f32 0.0, %v321
      %v323 = vpop.f32.mrb[0].mxu0
      %324 = vmatprep.mubr.bf16.mxu0 0
      %325 = vmatmul.mubr.bf16.gmra.mrb[0].mxu0 %v214
      %v326 = vpop.f32.mrb[0].mxu0
      %v327 = vadd.f32 0.0, %v326
      %v328 = vpop.f32.mrb[0].mxu0
      %v329 = vpop.f32.mrb[0].mxu0
      %v330 = vadd.f32 0.0, %v329
      %v331 = vpop.f32.mrb[0].mxu0
      %332 = vmatprep.mubr.bf16.mxu0 0
      %333 = vmatmul.mubr.bf16.gmra.mrb[0].mxu0 %v215
      %v334 = vpop.f32.mrb[0].mxu0
      %v335 = vadd.f32 0.0, %v334
      %v336 = vpop.f32.mrb[0].mxu0
      %v337 = vpop.f32.mrb[0].mxu0
      %v338 = vadd.f32 0.0, %v337
      %v339 = vpop.f32.mrb[0].mxu0
      %340 = vmatprep.mubr.bf16.mxu0 0
      %341 = vmatmul.mubr.bf16.gmra.mrb[0].mxu0 %v216
      %v342 = vpop.f32.mrb[0].mxu0
      %v343 = vadd.f32 0.0, %v342
      %v344 = vpop.f32.mrb[0].mxu0
      %v345 = vpop.f32.mrb[0].mxu0
      %v346 = vadd.f32 0.0, %v345
      %v347 = vpop.f32.mrb[0].mxu0
      %348 = vmatprep.mubr.bf16.mxu0 0
      %349 = vmatmul.mubr.bf16.gmra.mrb[0].mxu0 %v217
      %v350 = vpop.f32.mrb[0].mxu0
      %v351 = vadd.f32 0.0, %v350
      %v352 = vpop.f32.mrb[0].mxu0
      %v353 = vpop.f32.mrb[0].mxu0
      %v354 = vadd.f32 0.0, %v353
      %v355 = vpop.f32.mrb[0].mxu0
      %356 = vmatprep.mubr.bf16.mxu0 0
      %357 = vmatmul.mubr.bf16.gmra.mrb[0].mxu0 %v218
      %v358 = vpop.f32.mrb[0].mxu0
      %v359 = vadd.f32 0.0, %v358
      %v360 = vpop.f32.mrb[0].mxu0
      %v361 = vpop.f32.mrb[0].mxu0
      %v362 = vadd.f32 0.0, %v361
      %v363 = vpop.f32.mrb[0].mxu0
      %364 = vmatprep.mubr.bf16.mxu0 0
      %365 = vmatmul.mubr.bf16.gmra.mrb[0].mxu0 %v219
      %v366 = vpop.f32.mrb[0].mxu0
      %v367 = vadd.f32 0.0, %v366
      %v368 = vpop.f32.mrb[0].mxu0
      %v369 = vpop.f32.mrb[0].mxu0
      %v370 = vadd.f32 0.0, %v369
      %v371 = vpop.f32.mrb[0].mxu0
      %372 = vdwg.mxu0
      %v373 = vpack.c.bf16 %v314, %v311
      %v374 = vpack.c.bf16 %v322, %v319
      %v375 = vpack.c.bf16 %v330, %v327
      %v376 = vpack.c.bf16 %v338, %v335
      %v377 = vpack.c.bf16 %v346, %v343
      %v378 = vpack.c.bf16 %v354, %v351
      %v379 = vpack.c.bf16 %v362, %v359
      %v380 = vpack.c.bf16 %v370, %v367
      %v389 = vunpack.c.l.b16 %v373
      %v390 = vunpack.c.h.b16 %v373
      %v391 = vunpack.c.l.b16 %v374
      %v392 = vunpack.c.h.b16 %v374
      %v393 = vunpack.c.l.b16 %v375
      %v394 = vunpack.c.h.b16 %v375
      %v395 = vunpack.c.l.b16 %v376
      %v396 = vunpack.c.h.b16 %v376
      %v397 = vunpack.c.l.b16 %v377
      %v398 = vunpack.c.h.b16 %v377
      %v399 = vunpack.c.l.b16 %v378
      %v400 = vunpack.c.h.b16 %v378
      %v401 = vunpack.c.l.b16 %v379
      %v402 = vunpack.c.h.b16 %v379
      %v403 = vunpack.c.l.b16 %v380
      %v404 = vunpack.c.h.b16 %v380
      %v405 = vpack.c.b16 %v389, %v389
      %v406 = vpack.c.b16 %v390, %v390
      %v407 = vpack.c.b16 %v391, %v391
      %v408 = vpack.c.b16 %v392, %v392
      %v409 = vpack.c.b16 %v393, %v393
      %v410 = vpack.c.b16 %v394, %v394
      %v411 = vpack.c.b16 %v395, %v395
      %v412 = vpack.c.b16 %v396, %v396
      %v413 = vpack.c.b16 %v397, %v397
      %v414 = vpack.c.b16 %v398, %v398
      %v415 = vpack.c.b16 %v399, %v399
      %v416 = vpack.c.b16 %v400, %v400
      %v417 = vpack.c.b16 %v401, %v401
      %v418 = vpack.c.b16 %v402, %v402
      %v419 = vpack.c.b16 %v403, %v403
      %v420 = vpack.c.b16 %v404, %v404
      %437 = vst [vmem:[%s145] sm:$0xf] %v405
      %438 = vst [vmem:[%s145 + $0x4] sm:$0xf] %v406
      %439 = vst [vmem:[%s145 + $0x8] sm:$0xf] %v407
      %440 = vst [vmem:[%s145 + $0xc] sm:$0xf] %v408
      %441 = vst [vmem:[%s145 + $0x10] sm:$0xf] %v409
      %442 = vst [vmem:[%s145 + $0x14] sm:$0xf] %v410
      %443 = vst [vmem:[%s145 + $0x18] sm:$0xf] %v411
      %444 = vst [vmem:[%s145 + $0x1c] sm:$0xf] %v412
      %445 = vst [vmem:[%s145 + $0x20] sm:$0xf] %v413
      %446 = vst [vmem:[%s145 + $0x24] sm:$0xf] %v414
      %447 = vst [vmem:[%s145 + $0x28] sm:$0xf] %v415
      %448 = vst [vmem:[%s145 + $0x2c] sm:$0xf] %v416
      %449 = vst [vmem:[%s145 + $0x30] sm:$0xf] %v417
      %450 = vst [vmem:[%s145 + $0x34] sm:$0xf] %v418
      %451 = vst [vmem:[%s145 + $0x38] sm:$0xf] %v419
      %452 = vst [vmem:[%s145 + $0x3c] sm:$0xf] %v420
      %s453 = smul.u32 16, %s13
      %p454 = scmp.lt.s32.totalorder %s453, 31
      %s455 = scalar_select %p454, %s453, 31
      %s456 = smul.addr %s455, 4
      %s457 = scalar_lea.vmem %s2, %s456
      // Predicated region
      $region29: #{gcn_forward.6} parent=27 // pred_check
        %p458 = pneg %p78
      $region30: #{gcn_forward.6} parent=27 // pred_check_branch
        %460 = sbr.rel (%p458) target = $region32
      $region31: #{gcn_forward.6} parent=27 // pred_region
        %s461 = smul.u32 16, %s13
      $region32: #{gcn_forward.6} parent=27 // pred_fallthru
        _
    $region28: #{gcn_forward.6} parent=5 // pred_fallthru
      _
    %p462 = scmp.le.s32.totalorder 2, %s8
    // Predicated region
    $region33: #{gcn_forward.6} parent=5 // pred_check
      %p463 = pneg %p462
    $region34: #{gcn_forward.6} parent=5 // pred_check_branch
      %465 = sbr.rel (%p463) target = $region36
    $region35: #{gcn_forward.6} parent=5 // pred_region
      %s466 = ssub.s32 %s8, 2
      // Predicated region
      $region37: #{gcn_forward.6} parent=35 // pred_check
        %p467 = pneg %p84
      $region38: #{gcn_forward.6} parent=35 // pred_check_branch
        %469 = sbr.rel (%p467) target = $region40
      $region39: #{gcn_forward.6} parent=35 // pred_region
        %s470 = smul.u32 16, %s14
        %p471 = scmp.lt.s32.totalorder %s470, 31
        %s472 = scalar_select %p471, %s470, 31
        %s473 = smul.addr %s472, 4
        %s474 = scalar_lea.vmem %s2, %s473
      $region40: #{gcn_forward.6} parent=35 // pred_fallthru
        _
    $region36: #{gcn_forward.6} parent=5 // pred_fallthru
      _
  $region6: #{gcn_forward.6} parent=0 // loop_footer
    %s12 = sadd.s32 1, %s8
  $region7: #{gcn_forward.6} parent=0 // loop_footer_branch
    %7 = sbr.rel target = $region3
  $region8: #{gcn_forward.6} parent=0 // loop_exit
    _

// kernel: gcn_forward.7
$region0: #{gcn_forward.7}
  #allocation0 [shape = 'u32[]', space=smem, size = 0x4, offset = 0x4, fixed_abs, tag = 'smem constant byte address 0x4 - core index']
  #allocation1 [shape = 'u32[144,128]{1,0:T(1,128)}', space=vmem, size = 0x12000, scoped, tag = 'internal scratch']
  #allocation2 [shape = 'f32[128,128]{1,0:T(8,128)}', space=vmem, size = 0x10000, scoped, tag = 'scratch operand']
  %s0 = inlined_call_operand.vmem [shape: bf16[256,256], index: 0, kind: input, shape index: {}]
  %s1 = inlined_call_operand.vmem [shape: bf16[256,128], index: 1, kind: input, shape index: {}]
  %s2 = inlined_call_operand.vmem [shape: f32[1,128], index: 2, kind: input, shape index: {}]
  %s3 = inlined_call_operand.vmem [shape: bf16[256,128], index: 3, kind: output, shape index: {}]
  %s4 = sld [smem:[#allocation0]]
  $region57: #{gcn_forward.7} parent=0
    _
  %s6 = ssub.s32 1, %s4
  %s7 = scalar_select 0, %s6, %s4
  loop: start=0, step=1, limit=4
  $region2: #{gcn_forward.7} parent=0 // loop_pre_header
    _
  $region3: #{gcn_forward.7} parent=0 // loop_header
    %s9 = sphi 0, %s13
    %p10 = scmp.ge.s32.totalorder %s9, 4
    %s16 = sphi 0, %s28
    %s17 = sphi 0, %s24
    %s18 = sphi 0, %s16
    %s19 = sphi 0, %s17
    %s20 = sphi 0, %s18
    %s21 = sphi 0, %s19
    %s33 = sphi 0, %s35
    %s36 = sphi 0, %s33
    %s37 = sphi 0, %s36
    %s53 = sphi 0, %s37
    %s57 = sphi 0, %s57
    %s59 = sphi 0, %s57
    %s60 = sphi 0, %s59
    %s74 = sphi 0, %s60
    %s78 = sphi 0, %s78
    %s80 = sphi 0, %s78
    %s81 = sphi 0, %s80
    %s95 = sphi 0, %s81
    %s101 = sphi 0, %s103
    %s104 = sphi 0, %s101
    %s105 = sphi 0, %s104
    %s121 = sphi 0, %s105
  $region4: #{gcn_forward.7} parent=0 // loop_header_branch
    %12 = sbr.rel (%p10) target = $region8
  $region5: #{gcn_forward.7} parent=0 // loop_body
    %s14 = ssub.s32 %s9, 1
    %s15 = ssub.s32 %s9, 2
    %s22 = sadd.s32 1, %s17
    %p23 = scmp.ge.s32.totalorder %s22, 1
    %s24 = scalar_select %p23, 0, %s22
    %s25 = sadd.s32 1, %s16
    %s26 = scalar_select %p23, %s25, %s16
    %p27 = scmp.ge.s32.totalorder %s26, 2
    %s28 = scalar_select %p27, 0, %s26
    %s29 = ssub.s32 %s16, %s28
    %s30 = ssub.s32 %s17, %s24
    %s31 = sor.u32 %s29, %s30
    %p32 = scmp.eq.s32.totalorder %s31, 0
    %s34 = sadd.s32 %s33, 1
    %s35 = scalar_select %p32, %s33, %s34
    %p38 = pneg %p32
    %p39 = scmp.eq.s32.totalorder %s9, 1
    %p40 = por %p38, %p39
    %p41 = scmp.ne.s32.totalorder %s33, %s36
    %p42 = scmp.eq.s32.totalorder %s9, 0
    %p43 = por %p41, %p42
    %p44 = scmp.ne.s32.totalorder %s33, %s36
    %p45 = scmp.eq.s32.totalorder %s14, 1
    %p46 = por %p44, %p45
    %p47 = scmp.ne.s32.totalorder %s36, %s37
    %p48 = scmp.eq.s32.totalorder %s14, 0
    %p49 = por %p47, %p48
    %p50 = scmp.ne.s32.totalorder %s36, %s37
    %p51 = scmp.eq.s32.totalorder %s15, 1
    %p52 = por %p50, %p51
    %p54 = scmp.ne.s32.totalorder %s37, %s53
    %p55 = scmp.eq.s32.totalorder %s15, 0
    %p56 = por %p54, %p55
    %s58 = sadd.s32 %s57, 1
    %p61 = scmp.eq.s32.totalorder %s9, 1
    %p62 = scmp.ne.s32.totalorder %s57, %s59
    %p63 = scmp.eq.s32.totalorder %s9, 0
    %p64 = por %p62, %p63
    %p65 = scmp.ne.s32.totalorder %s57, %s59
    %p66 = scmp.eq.s32.totalorder %s14, 1
    %p67 = por %p65, %p66
    %p68 = scmp.ne.s32.totalorder %s59, %s60
    %p69 = scmp.eq.s32.totalorder %s14, 0
    %p70 = por %p68, %p69
    %p71 = scmp.ne.s32.totalorder %s59, %s60
    %p72 = scmp.eq.s32.totalorder %s15, 1
    %p73 = por %p71, %p72
    %p75 = scmp.ne.s32.totalorder %s60, %s74
    %p76 = scmp.eq.s32.totalorder %s15, 0
    %p77 = por %p75, %p76
    %s79 = sadd.s32 %s78, 1
    %p82 = scmp.eq.s32.totalorder %s9, 1
    %p83 = scmp.ne.s32.totalorder %s78, %s80
    %p84 = scmp.eq.s32.totalorder %s9, 0
    %p85 = por %p83, %p84
    %p86 = scmp.ne.s32.totalorder %s78, %s80
    %p87 = scmp.eq.s32.totalorder %s14, 1
    %p88 = por %p86, %p87
    %p89 = scmp.ne.s32.totalorder %s80, %s81
    %p90 = scmp.eq.s32.totalorder %s14, 0
    %p91 = por %p89, %p90
    %p92 = scmp.ne.s32.totalorder %s80, %s81
    %p93 = scmp.eq.s32.totalorder %s15, 1
    %p94 = por %p92, %p93
    %p96 = scmp.ne.s32.totalorder %s81, %s95
    %p97 = scmp.eq.s32.totalorder %s15, 0
    %p98 = por %p96, %p97
    %s99 = ssub.s32 %s16, %s28
    %p100 = scmp.eq.s32.totalorder %s99, 0
    %s102 = sadd.s32 %s101, 1
    %s103 = scalar_select %p100, %s101, %s102
    %p106 = pneg %p100
    %p107 = scmp.eq.s32.totalorder %s9, 1
    %p108 = por %p106, %p107
    %p109 = scmp.ne.s32.totalorder %s101, %s104
    %p110 = scmp.eq.s32.totalorder %s9, 0
    %p111 = por %p109, %p110
    %p112 = scmp.ne.s32.totalorder %s101, %s104
    %p113 = scmp.eq.s32.totalorder %s14, 1
    %p114 = por %p112, %p113
    %p115 = scmp.ne.s32.totalorder %s104, %s105
    %p116 = scmp.eq.s32.totalorder %s14, 0
    %p117 = por %p115, %p116
    %p118 = scmp.ne.s32.totalorder %s104, %s105
    %p119 = scmp.eq.s32.totalorder %s15, 1
    %p120 = por %p118, %p119
    %p122 = scmp.ne.s32.totalorder %s105, %s121
    %p123 = scmp.eq.s32.totalorder %s15, 0
    %p124 = por %p122, %p123
    %p125 = scmp.le.s32.totalorder 1, %s9
    %p126 = scmp.lt.s32.totalorder %s9, 3
    %p127 = pnand %p125, %p126
    %p128 = pneg %p127
    // Predicated region
    $region9: #{gcn_forward.7} parent=5 // pred_check
      _
    $region10: #{gcn_forward.7} parent=5 // pred_check_branch
      %130 = sbr.rel (%p127) target = $region12
    $region11: #{gcn_forward.7} parent=5 // pred_region
      %s131 = ssub.s32 %s9, 1
      // Predicated region
      $region13: #{gcn_forward.7} parent=11 // pred_check
        %p132 = pneg %p70
      $region14: #{gcn_forward.7} parent=11 // pred_check_branch
        %134 = sbr.rel (%p132) target = $region16
      $region15: #{gcn_forward.7} parent=11 // pred_region
        _
      $region16: #{gcn_forward.7} parent=11 // pred_fallthru
        _
      // Predicated region
      $region17: #{gcn_forward.7} parent=11 // pred_check
        %p135 = pneg %p91
      $region18: #{gcn_forward.7} parent=11 // pred_check_branch
        %137 = sbr.rel (%p135) target = $region20
      $region19: #{gcn_forward.7} parent=11 // pred_region
        _
      $region20: #{gcn_forward.7} parent=11 // pred_fallthru
        _
    $region12: #{gcn_forward.7} parent=5 // pred_fallthru
      _
    %p138 = scmp.lt.s32.totalorder %s9, 2
    // Predicated region
    $region21: #{gcn_forward.7} parent=5 // pred_check
      %p139 = pneg %p138
    $region22: #{gcn_forward.7} parent=5 // pred_check_branch
      %141 = sbr.rel (%p139) target = $region24
    $region23: #{gcn_forward.7} parent=5 // pred_region
      // Predicated region
      $region25: #{gcn_forward.7} parent=23 // pred_check
        %p142 = pneg %p43
      $region26: #{gcn_forward.7} parent=23 // pred_check_branch
        %144 = sbr.rel (%p142) target = $region28
      $region27: #{gcn_forward.7} parent=23 // pred_region
        %s145 = smul.u32 16, %s16
        %s146 = smul.u32 2, %s17
        %p147 = scmp.lt.s32.totalorder %s145, 31
        %s148 = scalar_select %p147, %s145, 31
        %p149 = scmp.lt.s32.totalorder %s146, 1
        %s150 = scalar_select %p149, %s146, 1
        %s151 = smul.addr %s148, 2
        %s152 = sadd.s32 %s150, %s151
        %s153 = smul.addr %s152, 4
        %s154 = scalar_lea.vmem %s0, %s153
        %s155 = smul.u32 16, %s16
        %s156 = smul.u32 2, %s17
      $region28: #{gcn_forward.7} parent=23 // pred_fallthru
        _
    $region24: #{gcn_forward.7} parent=5 // pred_fallthru
      _
    %p157 = scmp.le.s32.totalorder 1, %s9
    %p158 = scmp.lt.s32.totalorder %s9, 3
    %p159 = pnand %p157, %p158
    %p160 = pneg %p159
    // Predicated region
    $region29: #{gcn_forward.7} parent=5 // pred_check
      _
    $region30: #{gcn_forward.7} parent=5 // pred_check_branch
      %162 = sbr.rel (%p159) target = $region32
    $region31: #{gcn_forward.7} parent=5 // pred_region
      %s163 = ssub.s32 %s9, 1
      %s164 = smul.u32 16, %s18
      %s165 = smul.u32 2, %s19
      %p166 = scmp.lt.s32.totalorder %s164, 31
      %s167 = scalar_select %p166, %s164, 31
      %p168 = scmp.lt.s32.totalorder %s165, 1
      %s169 = scalar_select %p168, %s165, 1
      %s170 = smul.addr %s167, 2
      %s171 = sadd.s32 %s169, %s170
      %s172 = smul.addr %s171, 4
      %s173 = scalar_lea.vmem %s0, %s172
      %p174 = pneg %p49
      %p175 = pneg %p46
      %p176 = pneg %p70
      %p177 = pneg %p67
      %p178 = pneg %p91
      %p179 = pneg %p88
      %p180 = pneg %p117
      %p181 = pneg %p114
      %s182 = smul.u32 16, %s18
      %p183 = scmp.lt.s32.totalorder %s182, 31
      %s184 = scalar_select %p183, %s182, 31
      %s185 = smul.addr %s184, 4
      %s186 = scalar_lea.vmem %s3, %s185
      %s187 = smul.u32 16, %s18
      %s188 = smul.u32 2, %s19
      %p189 = scmp.lt.s32.totalorder %s187, 31
      %s190 = scalar_select %p189, %s187, 31
      %p191 = scmp.lt.s32.totalorder %s188, 1
      %s192 = scalar_select %p191, %s188, 1
      %s193 = smul.addr %s190, 2
      %s194 = sadd.s32 %s192, %s193
      %s195 = smul.addr %s194, 4
      %s196 = scalar_lea.vmem %s0, %s195
      %s197 = smul.u32 16, %s18
      %s198 = smul.u32 2, %s19
      %s199 = smul.u32 16, %s18
      %p200 = scmp.lt.s32.totalorder %s199, 31
      %s201 = scalar_select %p200, %s199, 31
      %s202 = smul.addr %s201, 4
      %s203 = scalar_lea.vmem %s3, %s202
      %s204 = smul.u32 16, %s18
      %s206 = smul.u32 %s19, 256
      %v207 = vld [vmem:[%s196] sm:$0xff]
      %v208 = vld [vmem:[%s196 + $0x8] sm:$0xff]
      %v209 = vld [vmem:[%s196 + $0x10] sm:$0xff]
      %v210 = vld [vmem:[%s196 + $0x18] sm:$0xff]
      %v211 = vld [vmem:[%s196 + $0x20] sm:$0xff]
      %v212 = vld [vmem:[%s196 + $0x28] sm:$0xff]
      %v213 = vld [vmem:[%s196 + $0x30] sm:$0xff]
      %v214 = vld [vmem:[%s196 + $0x38] sm:$0xff]
      %v215 = vld [vmem:[%s196 + $0x40] sm:$0xff]
      %v216 = vld [vmem:[%s196 + $0x48] sm:$0xff]
      %v217 = vld [vmem:[%s196 + $0x50] sm:$0xff]
      %v218 = vld [vmem:[%s196 + $0x58] sm:$0xff]
      %v219 = vld [vmem:[%s196 + $0x60] sm:$0xff]
      %v220 = vld [vmem:[%s196 + $0x68] sm:$0xff]
      %v221 = vld [vmem:[%s196 + $0x70] sm:$0xff]
      %v222 = vld [vmem:[%s196 + $0x78] sm:$0xff]
      %s223 = sshra.s32 %s206, 3
      %s224 = sand.u32 %s206, 7
      %s225 = smul.addr %s223, 4
      %s226 = scalar_lea.vmem %s1, %s225
      %v227 = vld [vmem:[%s226] sm:$0xf]
      %v228 = vld [vmem:[%s226 + $0x4] sm:$0xf]
      %v229 = vld [vmem:[%s226 + $0x8] sm:$0xf]
      %v230 = vld [vmem:[%s226 + $0xc] sm:$0xf]
      %v231 = vld [vmem:[%s226 + $0x10] sm:$0xf]
      %v232 = vld [vmem:[%s226 + $0x14] sm:$0xf]
      %v233 = vld [vmem:[%s226 + $0x18] sm:$0xf]
      %v234 = vld [vmem:[%s226 + $0x1c] sm:$0xf]
      %v235 = vld [vmem:[%s226 + $0x20] sm:$0xf]
      %v236 = vld [vmem:[%s226 + $0x24] sm:$0xf]
      %v237 = vld [vmem:[%s226 + $0x28] sm:$0xf]
      %v238 = vld [vmem:[%s226 + $0x2c] sm:$0xf]
      %v239 = vld [vmem:[%s226 + $0x30] sm:$0xf]
      %v240 = vld [vmem:[%s226 + $0x34] sm:$0xf]
      %v241 = vld [vmem:[%s226 + $0x38] sm:$0xf]
      %v242 = vld [vmem:[%s226 + $0x3c] sm:$0xf]
      %v243 = vld [vmem:[%s226 + $0x40] sm:$0xf]
      %v244 = vld [vmem:[%s226 + $0x44] sm:$0xf]
      %v245 = vld [vmem:[%s226 + $0x48] sm:$0xf]
      %v246 = vld [vmem:[%s226 + $0x4c] sm:$0xf]
      %v247 = vld [vmem:[%s226 + $0x50] sm:$0xf]
      %v248 = vld [vmem:[%s226 + $0x54] sm:$0xf]
      %v249 = vld [vmem:[%s226 + $0x58] sm:$0xf]
      %v250 = vld [vmem:[%s226 + $0x5c] sm:$0xf]
      %v251 = vld [vmem:[%s226 + $0x60] sm:$0xf]
      %v252 = vld [vmem:[%s226 + $0x64] sm:$0xf]
      %v253 = vld [vmem:[%s226 + $0x68] sm:$0xf]
      %v254 = vld [vmem:[%s226 + $0x6c] sm:$0xf]
      %v255 = vld [vmem:[%s226 + $0x70] sm:$0xf]
      %v256 = vld [vmem:[%s226 + $0x74] sm:$0xf]
      %v257 = vld [vmem:[%s226 + $0x78] sm:$0xf]
      %v258 = vld [vmem:[%s226 + $0x7c] sm:$0xf]
      %v275 = vunpack.c.l.b16 %v207
      %v276 = vunpack.c.h.b16 %v207
      %v277 = vunpack.c.l.b16 %v208
      %v278 = vunpack.c.h.b16 %v208
      %v279 = vunpack.c.l.b16 %v209
      %v280 = vunpack.c.h.b16 %v209
      %v281 = vunpack.c.l.b16 %v210
      %v282 = vunpack.c.h.b16 %v210
      %v283 = vunpack.c.l.b16 %v211
      %v284 = vunpack.c.h.b16 %v211
      %v285 = vunpack.c.l.b16 %v212
      %v286 = vunpack.c.h.b16 %v212
      %v287 = vunpack.c.l.b16 %v213
      %v288 = vunpack.c.h.b16 %v213
      %v289 = vunpack.c.l.b16 %v214
      %v290 = vunpack.c.h.b16 %v214
      %v291 = vunpack.c.l.b16 %v215
      %v292 = vunpack.c.h.b16 %v215
      %v293 = vunpack.c.l.b16 %v216
      %v294 = vunpack.c.h.b16 %v216
      %v295 = vunpack.c.l.b16 %v217
      %v296 = vunpack.c.h.b16 %v217
      %v297 = vunpack.c.l.b16 %v218
      %v298 = vunpack.c.h.b16 %v218
      %v299 = vunpack.c.l.b16 %v219
      %v300 = vunpack.c.h.b16 %v219
      %v301 = vunpack.c.l.b16 %v220
      %v302 = vunpack.c.h.b16 %v220
      %v303 = vunpack.c.l.b16 %v221
      %v304 = vunpack.c.h.b16 %v221
      %v305 = vunpack.c.l.b16 %v222
      %v306 = vunpack.c.h.b16 %v222
      %v307 = vpack.c.b16 %v277, %v275
      %v308 = vpack.c.b16 %v278, %v276
      %v309 = vpack.c.b16 %v281, %v279
      %v310 = vpack.c.b16 %v282, %v280
      %v311 = vpack.c.b16 %v285, %v283
      %v312 = vpack.c.b16 %v286, %v284
      %v313 = vpack.c.b16 %v289, %v287
      %v314 = vpack.c.b16 %v290, %v288
      %v315 = vpack.c.b16 %v293, %v291
      %v316 = vpack.c.b16 %v294, %v292
      %v317 = vpack.c.b16 %v297, %v295
      %v318 = vpack.c.b16 %v298, %v296
      %v319 = vpack.c.b16 %v301, %v299
      %v320 = vpack.c.b16 %v302, %v300
      %v321 = vpack.c.b16 %v305, %v303
      %v322 = vpack.c.b16 %v306, %v304
      %v371 = vunpack.c.l.b16 %v227
      %v372 = vunpack.c.l.b16 %v228
      %v373 = vunpack.c.l.b16 %v229
      %v374 = vunpack.c.l.b16 %v230
      %v375 = vunpack.c.l.b16 %v231
      %v376 = vunpack.c.l.b16 %v232
      %v377 = vunpack.c.l.b16 %v233
      %v378 = vunpack.c.l.b16 %v234
      %v379 = vunpack.c.l.b16 %v235
      %v380 = vunpack.c.l.b16 %v236
      %v381 = vunpack.c.l.b16 %v237
      %v382 = vunpack.c.l.b16 %v238
      %v383 = vunpack.c.l.b16 %v239
      %v384 = vunpack.c.l.b16 %v240
      %v385 = vunpack.c.l.b16 %v241
      %v386 = vunpack.c.l.b16 %v242
      %v387 = vunpack.c.l.b16 %v243
      %v388 = vunpack.c.l.b16 %v244
      %v389 = vunpack.c.l.b16 %v245
      %v390 = vunpack.c.l.b16 %v246
      %v391 = vunpack.c.l.b16 %v247
      %v392 = vunpack.c.l.b16 %v248
      %v393 = vunpack.c.l.b16 %v249
      %v394 = vunpack.c.l.b16 %v250
      %v395 = vunpack.c.l.b16 %v251
      %v396 = vunpack.c.l.b16 %v252
      %v397 = vunpack.c.l.b16 %v253
      %v398 = vunpack.c.l.b16 %v254
      %v399 = vunpack.c.l.b16 %v255
      %v400 = vunpack.c.l.b16 %v256
      %v401 = vunpack.c.l.b16 %v257
      %v402 = vunpack.c.l.b16 %v258
      %v403 = vpack.c.b16 %v372, %v371
      %v404 = vpack.c.b16 %v374, %v373
      %v405 = vpack.c.b16 %v376, %v375
      %v406 = vpack.c.b16 %v378, %v377
      %v407 = vpack.c.b16 %v380, %v379
      %v408 = vpack.c.b16 %v382, %v381
      %v409 = vpack.c.b16 %v384, %v383
      %v410 = vpack.c.b16 %v386, %v385
      %v411 = vpack.c.b16 %v388, %v387
      %v412 = vpack.c.b16 %v390, %v389
      %v413 = vpack.c.b16 %v392, %v391
      %v414 = vpack.c.b16 %v394, %v393
      %v415 = vpack.c.b16 %v396, %v395
      %v416 = vpack.c.b16 %v398, %v397
      %v417 = vpack.c.b16 %v400, %v399
      %v418 = vpack.c.b16 %v402, %v401
      %435 = vmatprep.subr.bf16.mxu0 0
      %436 = vmatpush1.bf16.msra.mxu0 %v403
      %437 = vmatprep.subr.bf16.mxu0 0
      %438 = vmatpush1.bf16.msra.mxu0 %v404
      %439 = vmatprep.subr.bf16.mxu0 0
      %440 = vmatpush1.bf16.msra.mxu0 %v405
      %441 = vmatprep.subr.bf16.mxu0 0
      %442 = vmatpush1.bf16.msra.mxu0 %v406
      %443 = vmatprep.subr.bf16.mxu0 0
      %444 = vmatpush1.bf16.msra.mxu0 %v407
      %445 = vmatprep.subr.bf16.mxu0 0
      %446 = vmatpush1.bf16.msra.mxu0 %v408
      %447 = vmatprep.subr.bf16.mxu0 0
      %448 = vmatpush1.bf16.msra.mxu0 %v409
      %449 = vmatprep.subr.bf16.mxu0 0
      %450 = vmatpush1.bf16.msra.mxu0 %v410
      %451 = vmatprep.subr.bf16.mxu0 0
      %452 = vmatpush1.bf16.msra.mxu0 %v411
      %453 = vmatprep.subr.bf16.mxu0 0
      %454 = vmatpush1.bf16.msra.mxu0 %v412
      %455 = vmatprep.subr.bf16.mxu0 0
      %456 = vmatpush1.bf16.msra.mxu0 %v413
      %457 = vmatprep.subr.bf16.mxu0 0
      %458 = vmatpush1.bf16.msra.mxu0 %v414
      %459 = vmatprep.subr.bf16.mxu0 0
      %460 = vmatpush1.bf16.msra.mxu0 %v415
      %461 = vmatprep.subr.bf16.mxu0 0
      %462 = vmatpush1.bf16.msra.mxu0 %v416
      %463 = vmatprep.subr.bf16.mxu0 0
      %464 = vmatpush1.bf16.msra.mxu0 %v417
      %465 = vmatprep.subr.bf16.mxu0 0
      %466 = vmatpush1.bf16.msra.mxu0 %v418
      %467 = vmatprep.mubr.bf16.mxu0 %v308
      %468 = vmatmul.mubr.bf16.gmra.mrb[0].mxu0 %v307
      %v469 = vpop.f32.mrb[0].mxu0
      %v470 = vadd.f32 0.0, %v469
      %v471 = vpop.f32.mrb[0].mxu0
      %v472 = vpop.f32.mrb[0].mxu0
      %v473 = vadd.f32 0.0, %v472
      %v474 = vpop.f32.mrb[0].mxu0
      %475 = vmatprep.mubr.bf16.mxu0 %v310
      %476 = vmatmul.mubr.bf16.gmra.mrb[0].mxu0 %v309
      %v477 = vpop.f32.mrb[0].mxu0
      %v478 = vadd.f32 0.0, %v477
      %v479 = vpop.f32.mrb[0].mxu0
      %v480 = vpop.f32.mrb[0].mxu0
      %v481 = vadd.f32 0.0, %v480
      %v482 = vpop.f32.mrb[0].mxu0
      %483 = vmatprep.mubr.bf16.mxu0 %v312
      %484 = vmatmul.mubr.bf16.gmra.mrb[0].mxu0 %v311
      %v485 = vpop.f32.mrb[0].mxu0
      %v486 = vadd.f32 0.0, %v485
      %v487 = vpop.f32.mrb[0].mxu0
      %v488 = vpop.f32.mrb[0].mxu0
      %v489 = vadd.f32 0.0, %v488
      %v490 = vpop.f32.mrb[0].mxu0
      %491 = vmatprep.mubr.bf16.mxu0 %v314
      %492 = vmatmul.mubr.bf16.gmra.mrb[0].mxu0 %v313
      %v493 = vpop.f32.mrb[0].mxu0
      %v494 = vadd.f32 0.0, %v493
      %v495 = vpop.f32.mrb[0].mxu0
      %v496 = vpop.f32.mrb[0].mxu0
      %v497 = vadd.f32 0.0, %v496
      %v498 = vpop.f32.mrb[0].mxu0
      %499 = vmatprep.mubr.bf16.mxu0 %v316
      %500 = vmatmul.mubr.bf16.gmra.mrb[0].mxu0 %v315
      %v501 = vpop.f32.mrb[0].mxu0
      %v502 = vadd.f32 0.0, %v501
      %v503 = vpop.f32.mrb[0].mxu0
      %v504 = vpop.f32.mrb[0].mxu0
      %v505 = vadd.f32 0.0, %v504
      %v506 = vpop.f32.mrb[0].mxu0
      %507 = vmatprep.mubr.bf16.mxu0 %v318
      %508 = vmatmul.mubr.bf16.gmra.mrb[0].mxu0 %v317
      %v509 = vpop.f32.mrb[0].mxu0
      %v510 = vadd.f32 0.0, %v509
      %v511 = vpop.f32.mrb[0].mxu0
      %v512 = vpop.f32.mrb[0].mxu0
      %v513 = vadd.f32 0.0, %v512
      %v514 = vpop.f32.mrb[0].mxu0
      %515 = vmatprep.mubr.bf16.mxu0 %v320
      %516 = vmatmul.mubr.bf16.gmra.mrb[0].mxu0 %v319
      %v517 = vpop.f32.mrb[0].mxu0
      %v518 = vadd.f32 0.0, %v517
      %v519 = vpop.f32.mrb[0].mxu0
      %v520 = vpop.f32.mrb[0].mxu0
      %v521 = vadd.f32 0.0, %v520
      %v522 = vpop.f32.mrb[0].mxu0
      %523 = vmatprep.mubr.bf16.mxu0 %v322
      %524 = vmatmul.mubr.bf16.gmra.mrb[0].mxu0 %v321
      %v525 = vpop.f32.mrb[0].mxu0
      %v526 = vadd.f32 0.0, %v525
      %v527 = vpop.f32.mrb[0].mxu0
      %v528 = vpop.f32.mrb[0].mxu0
      %v529 = vadd.f32 0.0, %v528
      %v530 = vpop.f32.mrb[0].mxu0
      %531 = vdwg.mxu0
      %p532 = scmp.eq.s32.totalorder %s19, 0
      // Predicated region
      $region33: #{gcn_forward.7} parent=31 // pred_check
        %p533 = pneg %p532
      $region34: #{gcn_forward.7} parent=31 // pred_check_branch
        %535 = sbr.rel (%p533) target = $region36
      $region35: #{gcn_forward.7} parent=31 // pred_region
        %536 = vst [vmem:[#allocation2] sm:$0xff] %v470
        %537 = vst [vmem:[#allocation2 + $0x8] sm:$0xff] %v473
        %538 = vst [vmem:[#allocation2 + $0x10] sm:$0xff] %v478
        %539 = vst [vmem:[#allocation2 + $0x18] sm:$0xff] %v481
        %540 = vst [vmem:[#allocation2 + $0x20] sm:$0xff] %v486
        %541 = vst [vmem:[#allocation2 + $0x28] sm:$0xff] %v489
        %542 = vst [vmem:[#allocation2 + $0x30] sm:$0xff] %v494
        %543 = vst [vmem:[#allocation2 + $0x38] sm:$0xff] %v497
        %544 = vst [vmem:[#allocation2 + $0x40] sm:$0xff] %v502
        %545 = vst [vmem:[#allocation2 + $0x48] sm:$0xff] %v505
        %546 = vst [vmem:[#allocation2 + $0x50] sm:$0xff] %v510
        %547 = vst [vmem:[#allocation2 + $0x58] sm:$0xff] %v513
        %548 = vst [vmem:[#allocation2 + $0x60] sm:$0xff] %v518
        %549 = vst [vmem:[#allocation2 + $0x68] sm:$0xff] %v521
        %550 = vst [vmem:[#allocation2 + $0x70] sm:$0xff] %v526
        %551 = vst [vmem:[#allocation2 + $0x78] sm:$0xff] %v529
      $region36: #{gcn_forward.7} parent=31 // pred_fallthru
        _
      %p552 = scmp.gt.s32.totalorder %s19, 0
      // Predicated region
      $region37: #{gcn_forward.7} parent=31 // pred_check
        %p553 = pneg %p552
      $region38: #{gcn_forward.7} parent=31 // pred_check_branch
        %555 = sbr.rel (%p553) target = $region40
      $region39: #{gcn_forward.7} parent=31 // pred_region
        %v556 = vld [vmem:[#allocation2] sm:$0xff]
        %v557 = vld [vmem:[#allocation2 + $0x8] sm:$0xff]
        %v558 = vld [vmem:[#allocation2 + $0x10] sm:$0xff]
        %v559 = vld [vmem:[#allocation2 + $0x18] sm:$0xff]
        %v560 = vld [vmem:[#allocation2 + $0x20] sm:$0xff]
        %v561 = vld [vmem:[#allocation2 + $0x28] sm:$0xff]
        %v562 = vld [vmem:[#allocation2 + $0x30] sm:$0xff]
        %v563 = vld [vmem:[#allocation2 + $0x38] sm:$0xff]
        %v564 = vld [vmem:[#allocation2 + $0x40] sm:$0xff]
        %v565 = vld [vmem:[#allocation2 + $0x48] sm:$0xff]
        %v566 = vld [vmem:[#allocation2 + $0x50] sm:$0xff]
        %v567 = vld [vmem:[#allocation2 + $0x58] sm:$0xff]
        %v568 = vld [vmem:[#allocation2 + $0x60] sm:$0xff]
        %v569 = vld [vmem:[#allocation2 + $0x68] sm:$0xff]
        %v570 = vld [vmem:[#allocation2 + $0x70] sm:$0xff]
        %v571 = vld [vmem:[#allocation2 + $0x78] sm:$0xff]
        %v572 = vadd.f32 %v556, %v470
        %v573 = vadd.f32 %v557, %v473
        %v574 = vadd.f32 %v558, %v478
        %v575 = vadd.f32 %v559, %v481
        %v576 = vadd.f32 %v560, %v486
        %v577 = vadd.f32 %v561, %v489
        %v578 = vadd.f32 %v562, %v494
        %v579 = vadd.f32 %v563, %v497
        %v580 = vadd.f32 %v564, %v502
        %v581 = vadd.f32 %v565, %v505
        %v582 = vadd.f32 %v566, %v510
        %v583 = vadd.f32 %v567, %v513
        %v584 = vadd.f32 %v568, %v518
        %v585 = vadd.f32 %v569, %v521
        %v586 = vadd.f32 %v570, %v526
        %v587 = vadd.f32 %v571, %v529
        %588 = vst [vmem:[#allocation2] sm:$0xff] %v572
        %589 = vst [vmem:[#allocation2 + $0x8] sm:$0xff] %v573
        %590 = vst [vmem:[#allocation2 + $0x10] sm:$0xff] %v574
        %591 = vst [vmem:[#allocation2 + $0x18] sm:$0xff] %v575
        %592 = vst [vmem:[#allocation2 + $0x20] sm:$0xff] %v576
        %593 = vst [vmem:[#allocation2 + $0x28] sm:$0xff] %v577
        %594 = vst [vmem:[#allocation2 + $0x30] sm:$0xff] %v578
        %595 = vst [vmem:[#allocation2 + $0x38] sm:$0xff] %v579
        %596 = vst [vmem:[#allocation2 + $0x40] sm:$0xff] %v580
        %597 = vst [vmem:[#allocation2 + $0x48] sm:$0xff] %v581
        %598 = vst [vmem:[#allocation2 + $0x50] sm:$0xff] %v582
        %599 = vst [vmem:[#allocation2 + $0x58] sm:$0xff] %v583
        %600 = vst [vmem:[#allocation2 + $0x60] sm:$0xff] %v584
        %601 = vst [vmem:[#allocation2 + $0x68] sm:$0xff] %v585
        %602 = vst [vmem:[#allocation2 + $0x70] sm:$0xff] %v586
        %603 = vst [vmem:[#allocation2 + $0x78] sm:$0xff] %v587
      $region40: #{gcn_forward.7} parent=31 // pred_fallthru
        _
      // Predicated region
      $region41: #{gcn_forward.7} parent=31 // pred_check
        %p604 = pneg %p532
      $region42: #{gcn_forward.7} parent=31 // pred_check_branch
        %606 = sbr.rel (%p604) target = $region44
      $region43: #{gcn_forward.7} parent=31 // pred_region
        %v607 = vld [vmem:[#allocation2] sm:$0xff]
        %v608 = vld [vmem:[#allocation2 + $0x8] sm:$0xff]
        %v609 = vld [vmem:[#allocation2 + $0x10] sm:$0xff]
        %v610 = vld [vmem:[#allocation2 + $0x18] sm:$0xff]
        %v611 = vld [vmem:[#allocation2 + $0x20] sm:$0xff]
        %v612 = vld [vmem:[#allocation2 + $0x28] sm:$0xff]
        %v613 = vld [vmem:[#allocation2 + $0x30] sm:$0xff]
        %v614 = vld [vmem:[#allocation2 + $0x38] sm:$0xff]
        %v615 = vld [vmem:[#allocation2 + $0x40] sm:$0xff]
        %v616 = vld [vmem:[#allocation2 + $0x48] sm:$0xff]
        %v617 = vld [vmem:[#allocation2 + $0x50] sm:$0xff]
        %v618 = vld [vmem:[#allocation2 + $0x58] sm:$0xff]
        %v619 = vld [vmem:[#allocation2 + $0x60] sm:$0xff]
        %v620 = vld [vmem:[#allocation2 + $0x68] sm:$0xff]
        %v621 = vld [vmem:[#allocation2 + $0x70] sm:$0xff]
        %v622 = vld [vmem:[#allocation2 + $0x78] sm:$0xff]
        %v623 = vld [vmem:[%s2] sm:$0x1]
        %v625 = vlaneseq
        %v626 = vshrl.u32 %v625, 7
        %v627 = vsub.s32 0, %v626
        %v628 = vrot.slane %v623, %v627
        %v630 = vadd.f32 %v607, %v628
        %v631 = vadd.f32 %v608, %v628
        %v632 = vadd.f32 %v609, %v628
        %v633 = vadd.f32 %v610, %v628
        %v634 = vadd.f32 %v611, %v628
        %v635 = vadd.f32 %v612, %v628
        %v636 = vadd.f32 %v613, %v628
        %v637 = vadd.f32 %v614, %v628
        %v638 = vadd.f32 %v615, %v628
        %v639 = vadd.f32 %v616, %v628
        %v640 = vadd.f32 %v617, %v628
        %v641 = vadd.f32 %v618, %v628
        %v642 = vadd.f32 %v619, %v628
        %v643 = vadd.f32 %v620, %v628
        %v644 = vadd.f32 %v621, %v628
        %v645 = vadd.f32 %v622, %v628
        %v646 = vmax.f32 %v630, 0.0
        %v647 = vmax.f32 %v631, 0.0
        %v648 = vmax.f32 %v632, 0.0
        %v649 = vmax.f32 %v633, 0.0
        %v650 = vmax.f32 %v634, 0.0
        %v651 = vmax.f32 %v635, 0.0
        %v652 = vmax.f32 %v636, 0.0
        %v653 = vmax.f32 %v637, 0.0
        %v654 = vmax.f32 %v638, 0.0
        %v655 = vmax.f32 %v639, 0.0
        %v656 = vmax.f32 %v640, 0.0
        %v657 = vmax.f32 %v641, 0.0
        %v658 = vmax.f32 %v642, 0.0
        %v659 = vmax.f32 %v643, 0.0
        %v660 = vmax.f32 %v644, 0.0
        %v661 = vmax.f32 %v645, 0.0
        %v662 = vpack.c.bf16 %v647, %v646
        %v663 = vpack.c.bf16 %v649, %v648
        %v664 = vpack.c.bf16 %v651, %v650
        %v665 = vpack.c.bf16 %v653, %v652
        %v666 = vpack.c.bf16 %v655, %v654
        %v667 = vpack.c.bf16 %v657, %v656
        %v668 = vpack.c.bf16 %v659, %v658
        %v669 = vpack.c.bf16 %v661, %v660
        %v678 = vunpack.c.l.b16 %v662
        %v679 = vunpack.c.h.b16 %v662
        %v680 = vunpack.c.l.b16 %v663
        %v681 = vunpack.c.h.b16 %v663
        %v682 = vunpack.c.l.b16 %v664
        %v683 = vunpack.c.h.b16 %v664
        %v684 = vunpack.c.l.b16 %v665
        %v685 = vunpack.c.h.b16 %v665
        %v686 = vunpack.c.l.b16 %v666
        %v687 = vunpack.c.h.b16 %v666
        %v688 = vunpack.c.l.b16 %v667
        %v689 = vunpack.c.h.b16 %v667
        %v690 = vunpack.c.l.b16 %v668
        %v691 = vunpack.c.h.b16 %v668
        %v692 = vunpack.c.l.b16 %v669
        %v693 = vunpack.c.h.b16 %v669
        %v694 = vpack.c.b16 %v678, %v678
        %v695 = vpack.c.b16 %v679, %v679
        %v696 = vpack.c.b16 %v680, %v680
        %v697 = vpack.c.b16 %v681, %v681
        %v698 = vpack.c.b16 %v682, %v682
        %v699 = vpack.c.b16 %v683, %v683
        %v700 = vpack.c.b16 %v684, %v684
        %v701 = vpack.c.b16 %v685, %v685
        %v702 = vpack.c.b16 %v686, %v686
        %v703 = vpack.c.b16 %v687, %v687
        %v704 = vpack.c.b16 %v688, %v688
        %v705 = vpack.c.b16 %v689, %v689
        %v706 = vpack.c.b16 %v690, %v690
        %v707 = vpack.c.b16 %v691, %v691
        %v708 = vpack.c.b16 %v692, %v692
        %v709 = vpack.c.b16 %v693, %v693
        %726 = vst [vmem:[%s203] sm:$0xf] %v694
        %727 = vst [vmem:[%s203 + $0x4] sm:$0xf] %v695
        %728 = vst [vmem:[%s203 + $0x8] sm:$0xf] %v696
        %729 = vst [vmem:[%s203 + $0xc] sm:$0xf] %v697
        %730 = vst [vmem:[%s203 + $0x10] sm:$0xf] %v698
        %731 = vst [vmem:[%s203 + $0x14] sm:$0xf] %v699
        %732 = vst [vmem:[%s203 + $0x18] sm:$0xf] %v700
        %733 = vst [vmem:[%s203 + $0x1c] sm:$0xf] %v701
        %734 = vst [vmem:[%s203 + $0x20] sm:$0xf] %v702
        %735 = vst [vmem:[%s203 + $0x24] sm:$0xf] %v703
        %736 = vst [vmem:[%s203 + $0x28] sm:$0xf] %v704
        %737 = vst [vmem:[%s203 + $0x2c] sm:$0xf] %v705
        %738 = vst [vmem:[%s203 + $0x30] sm:$0xf] %v706
        %739 = vst [vmem:[%s203 + $0x34] sm:$0xf] %v707
        %740 = vst [vmem:[%s203 + $0x38] sm:$0xf] %v708
        %741 = vst [vmem:[%s203 + $0x3c] sm:$0xf] %v709
      $region44: #{gcn_forward.7} parent=31 // pred_fallthru
        _
      %s742 = smul.u32 16, %s18
      %p743 = scmp.lt.s32.totalorder %s742, 31
      %s744 = scalar_select %p743, %s742, 31
      %s745 = smul.addr %s744, 4
      %s746 = scalar_lea.vmem %s3, %s745
      // Predicated region
      $region45: #{gcn_forward.7} parent=31 // pred_check
        %p747 = pneg %p114
      $region46: #{gcn_forward.7} parent=31 // pred_check_branch
        %749 = sbr.rel (%p747) target = $region48
      $region47: #{gcn_forward.7} parent=31 // pred_region
        %s750 = smul.u32 16, %s18
      $region48: #{gcn_forward.7} parent=31 // pred_fallthru
        _
    $region32: #{gcn_forward.7} parent=5 // pred_fallthru
      _
    %p751 = scmp.le.s32.totalorder 2, %s9
    // Predicated region
    $region49: #{gcn_forward.7} parent=5 // pred_check
      %p752 = pneg %p751
    $region50: #{gcn_forward.7} parent=5 // pred_check_branch
      %754 = sbr.rel (%p752) target = $region52
    $region51: #{gcn_forward.7} parent=5 // pred_region
      %s755 = ssub.s32 %s9, 2
      // Predicated region
      $region53: #{gcn_forward.7} parent=51 // pred_check
        %p756 = pneg %p120
      $region54: #{gcn_forward.7} parent=51 // pred_check_branch
        %758 = sbr.rel (%p756) target = $region56
      $region55: #{gcn_forward.7} parent=51 // pred_region
        %s759 = smul.u32 16, %s20
        %p760 = scmp.lt.s32.totalorder %s759, 31
        %s761 = scalar_select %p760, %s759, 31
        %s762 = smul.addr %s761, 4
        %s763 = scalar_lea.vmem %s3, %s762
      $region56: #{gcn_forward.7} parent=51 // pred_fallthru
        _
    $region52: #{gcn_forward.7} parent=5 // pred_fallthru
      _
  $region6: #{gcn_forward.7} parent=0 // loop_footer
    %s13 = sadd.s32 1, %s9
  $region7: #{gcn_forward.7} parent=0 // loop_footer_branch
    %8 = sbr.rel target = $region3
  $region8: #{gcn_forward.7} parent=0 // loop_exit
    _

// kernel: gcn_forward.11
$region0: #{gcn_forward.11}
  #allocation0 [shape = 'u32[]', space=smem, size = 0x4, offset = 0x4, fixed_abs, tag = 'smem constant byte address 0x4 - core index']
  #allocation1 [shape = 'u32[144,128]{1,0:T(1,128)}', space=vmem, size = 0x12000, scoped, tag = 'internal scratch']
  #allocation2 [shape = 'f32[128,128]{1,0:T(8,128)}', space=vmem, size = 0x10000, scoped, tag = 'scratch operand']
  %s0 = inlined_call_operand.vmem [shape: bf16[256,256], index: 0, kind: input, shape index: {}]
  %s1 = inlined_call_operand.vmem [shape: bf16[256,128], index: 1, kind: input, shape index: {}]
  %s2 = inlined_call_operand.vmem [shape: f32[1,128], index: 2, kind: input, shape index: {}]
  %s3 = inlined_call_operand.vmem [shape: f32[256,128], index: 3, kind: output, shape index: {}]
  %s4 = sld [smem:[#allocation0]]
  $region57: #{gcn_forward.11} parent=0
    _
  %s6 = ssub.s32 1, %s4
  %s7 = scalar_select 0, %s6, %s4
  loop: start=0, step=1, limit=4
  $region2: #{gcn_forward.11} parent=0 // loop_pre_header
    _
  $region3: #{gcn_forward.11} parent=0 // loop_header
    %s9 = sphi 0, %s13
    %p10 = scmp.ge.s32.totalorder %s9, 4
    %s16 = sphi 0, %s28
    %s17 = sphi 0, %s24
    %s18 = sphi 0, %s16
    %s19 = sphi 0, %s17
    %s20 = sphi 0, %s18
    %s21 = sphi 0, %s19
    %s33 = sphi 0, %s35
    %s36 = sphi 0, %s33
    %s37 = sphi 0, %s36
    %s53 = sphi 0, %s37
    %s57 = sphi 0, %s57
    %s59 = sphi 0, %s57
    %s60 = sphi 0, %s59
    %s74 = sphi 0, %s60
    %s78 = sphi 0, %s78
    %s80 = sphi 0, %s78
    %s81 = sphi 0, %s80
    %s95 = sphi 0, %s81
    %s101 = sphi 0, %s103
    %s104 = sphi 0, %s101
    %s105 = sphi 0, %s104
    %s121 = sphi 0, %s105
  $region4: #{gcn_forward.11} parent=0 // loop_header_branch
    %12 = sbr.rel (%p10) target = $region8
  $region5: #{gcn_forward.11} parent=0 // loop_body
    %s14 = ssub.s32 %s9, 1
    %s15 = ssub.s32 %s9, 2
    %s22 = sadd.s32 1, %s17
    %p23 = scmp.ge.s32.totalorder %s22, 1
    %s24 = scalar_select %p23, 0, %s22
    %s25 = sadd.s32 1, %s16
    %s26 = scalar_select %p23, %s25, %s16
    %p27 = scmp.ge.s32.totalorder %s26, 2
    %s28 = scalar_select %p27, 0, %s26
    %s29 = ssub.s32 %s16, %s28
    %s30 = ssub.s32 %s17, %s24
    %s31 = sor.u32 %s29, %s30
    %p32 = scmp.eq.s32.totalorder %s31, 0
    %s34 = sadd.s32 %s33, 1
    %s35 = scalar_select %p32, %s33, %s34
    %p38 = pneg %p32
    %p39 = scmp.eq.s32.totalorder %s9, 1
    %p40 = por %p38, %p39
    %p41 = scmp.ne.s32.totalorder %s33, %s36
    %p42 = scmp.eq.s32.totalorder %s9, 0
    %p43 = por %p41, %p42
    %p44 = scmp.ne.s32.totalorder %s33, %s36
    %p45 = scmp.eq.s32.totalorder %s14, 1
    %p46 = por %p44, %p45
    %p47 = scmp.ne.s32.totalorder %s36, %s37
    %p48 = scmp.eq.s32.totalorder %s14, 0
    %p49 = por %p47, %p48
    %p50 = scmp.ne.s32.totalorder %s36, %s37
    %p51 = scmp.eq.s32.totalorder %s15, 1
    %p52 = por %p50, %p51
    %p54 = scmp.ne.s32.totalorder %s37, %s53
    %p55 = scmp.eq.s32.totalorder %s15, 0
    %p56 = por %p54, %p55
    %s58 = sadd.s32 %s57, 1
    %p61 = scmp.eq.s32.totalorder %s9, 1
    %p62 = scmp.ne.s32.totalorder %s57, %s59
    %p63 = scmp.eq.s32.totalorder %s9, 0
    %p64 = por %p62, %p63
    %p65 = scmp.ne.s32.totalorder %s57, %s59
    %p66 = scmp.eq.s32.totalorder %s14, 1
    %p67 = por %p65, %p66
    %p68 = scmp.ne.s32.totalorder %s59, %s60
    %p69 = scmp.eq.s32.totalorder %s14, 0
    %p70 = por %p68, %p69
    %p71 = scmp.ne.s32.totalorder %s59, %s60
    %p72 = scmp.eq.s32.totalorder %s15, 1
    %p73 = por %p71, %p72
    %p75 = scmp.ne.s32.totalorder %s60, %s74
    %p76 = scmp.eq.s32.totalorder %s15, 0
    %p77 = por %p75, %p76
    %s79 = sadd.s32 %s78, 1
    %p82 = scmp.eq.s32.totalorder %s9, 1
    %p83 = scmp.ne.s32.totalorder %s78, %s80
    %p84 = scmp.eq.s32.totalorder %s9, 0
    %p85 = por %p83, %p84
    %p86 = scmp.ne.s32.totalorder %s78, %s80
    %p87 = scmp.eq.s32.totalorder %s14, 1
    %p88 = por %p86, %p87
    %p89 = scmp.ne.s32.totalorder %s80, %s81
    %p90 = scmp.eq.s32.totalorder %s14, 0
    %p91 = por %p89, %p90
    %p92 = scmp.ne.s32.totalorder %s80, %s81
    %p93 = scmp.eq.s32.totalorder %s15, 1
    %p94 = por %p92, %p93
    %p96 = scmp.ne.s32.totalorder %s81, %s95
    %p97 = scmp.eq.s32.totalorder %s15, 0
    %p98 = por %p96, %p97
    %s99 = ssub.s32 %s16, %s28
    %p100 = scmp.eq.s32.totalorder %s99, 0
    %s102 = sadd.s32 %s101, 1
    %s103 = scalar_select %p100, %s101, %s102
    %p106 = pneg %p100
    %p107 = scmp.eq.s32.totalorder %s9, 1
    %p108 = por %p106, %p107
    %p109 = scmp.ne.s32.totalorder %s101, %s104
    %p110 = scmp.eq.s32.totalorder %s9, 0
    %p111 = por %p109, %p110
    %p112 = scmp.ne.s32.totalorder %s101, %s104
    %p113 = scmp.eq.s32.totalorder %s14, 1
    %p114 = por %p112, %p113
    %p115 = scmp.ne.s32.totalorder %s104, %s105
    %p116 = scmp.eq.s32.totalorder %s14, 0
    %p117 = por %p115, %p116
    %p118 = scmp.ne.s32.totalorder %s104, %s105
    %p119 = scmp.eq.s32.totalorder %s15, 1
    %p120 = por %p118, %p119
    %p122 = scmp.ne.s32.totalorder %s105, %s121
    %p123 = scmp.eq.s32.totalorder %s15, 0
    %p124 = por %p122, %p123
    %p125 = scmp.le.s32.totalorder 1, %s9
    %p126 = scmp.lt.s32.totalorder %s9, 3
    %p127 = pnand %p125, %p126
    %p128 = pneg %p127
    // Predicated region
    $region9: #{gcn_forward.11} parent=5 // pred_check
      _
    $region10: #{gcn_forward.11} parent=5 // pred_check_branch
      %130 = sbr.rel (%p127) target = $region12
    $region11: #{gcn_forward.11} parent=5 // pred_region
      %s131 = ssub.s32 %s9, 1
      // Predicated region
      $region13: #{gcn_forward.11} parent=11 // pred_check
        %p132 = pneg %p70
      $region14: #{gcn_forward.11} parent=11 // pred_check_branch
        %134 = sbr.rel (%p132) target = $region16
      $region15: #{gcn_forward.11} parent=11 // pred_region
        _
      $region16: #{gcn_forward.11} parent=11 // pred_fallthru
        _
      // Predicated region
      $region17: #{gcn_forward.11} parent=11 // pred_check
        %p135 = pneg %p91
      $region18: #{gcn_forward.11} parent=11 // pred_check_branch
        %137 = sbr.rel (%p135) target = $region20
      $region19: #{gcn_forward.11} parent=11 // pred_region
        _
      $region20: #{gcn_forward.11} parent=11 // pred_fallthru
        _
    $region12: #{gcn_forward.11} parent=5 // pred_fallthru
      _
    %p138 = scmp.lt.s32.totalorder %s9, 2
    // Predicated region
    $region21: #{gcn_forward.11} parent=5 // pred_check
      %p139 = pneg %p138
    $region22: #{gcn_forward.11} parent=5 // pred_check_branch
      %141 = sbr.rel (%p139) target = $region24
    $region23: #{gcn_forward.11} parent=5 // pred_region
      // Predicated region
      $region25: #{gcn_forward.11} parent=23 // pred_check
        %p142 = pneg %p43
      $region26: #{gcn_forward.11} parent=23 // pred_check_branch
        %144 = sbr.rel (%p142) target = $region28
      $region27: #{gcn_forward.11} parent=23 // pred_region
        %s145 = smul.u32 16, %s16
        %s146 = smul.u32 2, %s17
        %p147 = scmp.lt.s32.totalorder %s145, 31
        %s148 = scalar_select %p147, %s145, 31
        %p149 = scmp.lt.s32.totalorder %s146, 1
        %s150 = scalar_select %p149, %s146, 1
        %s151 = smul.addr %s148, 2
        %s152 = sadd.s32 %s150, %s151
        %s153 = smul.addr %s152, 4
        %s154 = scalar_lea.vmem %s0, %s153
        %s155 = smul.u32 16, %s16
        %s156 = smul.u32 2, %s17
      $region28: #{gcn_forward.11} parent=23 // pred_fallthru
        _
    $region24: #{gcn_forward.11} parent=5 // pred_fallthru
      _
    %p157 = scmp.le.s32.totalorder 1, %s9
    %p158 = scmp.lt.s32.totalorder %s9, 3
    %p159 = pnand %p157, %p158
    %p160 = pneg %p159
    // Predicated region
    $region29: #{gcn_forward.11} parent=5 // pred_check
      _
    $region30: #{gcn_forward.11} parent=5 // pred_check_branch
      %162 = sbr.rel (%p159) target = $region32
    $region31: #{gcn_forward.11} parent=5 // pred_region
      %s163 = ssub.s32 %s9, 1
      %s164 = smul.u32 16, %s18
      %s165 = smul.u32 2, %s19
      %p166 = scmp.lt.s32.totalorder %s164, 31
      %s167 = scalar_select %p166, %s164, 31
      %p168 = scmp.lt.s32.totalorder %s165, 1
      %s169 = scalar_select %p168, %s165, 1
      %s170 = smul.addr %s167, 2
      %s171 = sadd.s32 %s169, %s170
      %s172 = smul.addr %s171, 4
      %s173 = scalar_lea.vmem %s0, %s172
      %p174 = pneg %p49
      %p175 = pneg %p46
      %p176 = pneg %p70
      %p177 = pneg %p67
      %p178 = pneg %p91
      %p179 = pneg %p88
      %p180 = pneg %p117
      %p181 = pneg %p114
      %s182 = smul.u32 16, %s18
      %p183 = scmp.lt.s32.totalorder %s182, 31
      %s184 = scalar_select %p183, %s182, 31
      %s185 = smul.addr %s184, 8
      %s186 = scalar_lea.vmem %s3, %s185
      %s187 = smul.u32 16, %s18
      %s188 = smul.u32 2, %s19
      %p189 = scmp.lt.s32.totalorder %s187, 31
      %s190 = scalar_select %p189, %s187, 31
      %p191 = scmp.lt.s32.totalorder %s188, 1
      %s192 = scalar_select %p191, %s188, 1
      %s193 = smul.addr %s190, 2
      %s194 = sadd.s32 %s192, %s193
      %s195 = smul.addr %s194, 4
      %s196 = scalar_lea.vmem %s0, %s195
      %s197 = smul.u32 16, %s18
      %s198 = smul.u32 2, %s19
      %s199 = smul.u32 16, %s18
      %p200 = scmp.lt.s32.totalorder %s199, 31
      %s201 = scalar_select %p200, %s199, 31
      %s202 = smul.addr %s201, 8
      %s203 = scalar_lea.vmem %s3, %s202
      %s204 = smul.u32 16, %s18
      %s206 = smul.u32 %s19, 256
      %v207 = vld [vmem:[%s196] sm:$0xff]
      %v208 = vld [vmem:[%s196 + $0x8] sm:$0xff]
      %v209 = vld [vmem:[%s196 + $0x10] sm:$0xff]
      %v210 = vld [vmem:[%s196 + $0x18] sm:$0xff]
      %v211 = vld [vmem:[%s196 + $0x20] sm:$0xff]
      %v212 = vld [vmem:[%s196 + $0x28] sm:$0xff]
      %v213 = vld [vmem:[%s196 + $0x30] sm:$0xff]
      %v214 = vld [vmem:[%s196 + $0x38] sm:$0xff]
      %v215 = vld [vmem:[%s196 + $0x40] sm:$0xff]
      %v216 = vld [vmem:[%s196 + $0x48] sm:$0xff]
      %v217 = vld [vmem:[%s196 + $0x50] sm:$0xff]
      %v218 = vld [vmem:[%s196 + $0x58] sm:$0xff]
      %v219 = vld [vmem:[%s196 + $0x60] sm:$0xff]
      %v220 = vld [vmem:[%s196 + $0x68] sm:$0xff]
      %v221 = vld [vmem:[%s196 + $0x70] sm:$0xff]
      %v222 = vld [vmem:[%s196 + $0x78] sm:$0xff]
      %s223 = sshra.s32 %s206, 3
      %s224 = sand.u32 %s206, 7
      %s225 = smul.addr %s223, 4
      %s226 = scalar_lea.vmem %s1, %s225
      %v227 = vld [vmem:[%s226] sm:$0xf]
      %v228 = vld [vmem:[%s226 + $0x4] sm:$0xf]
      %v229 = vld [vmem:[%s226 + $0x8] sm:$0xf]
      %v230 = vld [vmem:[%s226 + $0xc] sm:$0xf]
      %v231 = vld [vmem:[%s226 + $0x10] sm:$0xf]
      %v232 = vld [vmem:[%s226 + $0x14] sm:$0xf]
      %v233 = vld [vmem:[%s226 + $0x18] sm:$0xf]
      %v234 = vld [vmem:[%s226 + $0x1c] sm:$0xf]
      %v235 = vld [vmem:[%s226 + $0x20] sm:$0xf]
      %v236 = vld [vmem:[%s226 + $0x24] sm:$0xf]
      %v237 = vld [vmem:[%s226 + $0x28] sm:$0xf]
      %v238 = vld [vmem:[%s226 + $0x2c] sm:$0xf]
      %v239 = vld [vmem:[%s226 + $0x30] sm:$0xf]
      %v240 = vld [vmem:[%s226 + $0x34] sm:$0xf]
      %v241 = vld [vmem:[%s226 + $0x38] sm:$0xf]
      %v242 = vld [vmem:[%s226 + $0x3c] sm:$0xf]
      %v243 = vld [vmem:[%s226 + $0x40] sm:$0xf]
      %v244 = vld [vmem:[%s226 + $0x44] sm:$0xf]
      %v245 = vld [vmem:[%s226 + $0x48] sm:$0xf]
      %v246 = vld [vmem:[%s226 + $0x4c] sm:$0xf]
      %v247 = vld [vmem:[%s226 + $0x50] sm:$0xf]
      %v248 = vld [vmem:[%s226 + $0x54] sm:$0xf]
      %v249 = vld [vmem:[%s226 + $0x58] sm:$0xf]
      %v250 = vld [vmem:[%s226 + $0x5c] sm:$0xf]
      %v251 = vld [vmem:[%s226 + $0x60] sm:$0xf]
      %v252 = vld [vmem:[%s226 + $0x64] sm:$0xf]
      %v253 = vld [vmem:[%s226 + $0x68] sm:$0xf]
      %v254 = vld [vmem:[%s226 + $0x6c] sm:$0xf]
      %v255 = vld [vmem:[%s226 + $0x70] sm:$0xf]
      %v256 = vld [vmem:[%s226 + $0x74] sm:$0xf]
      %v257 = vld [vmem:[%s226 + $0x78] sm:$0xf]
      %v258 = vld [vmem:[%s226 + $0x7c] sm:$0xf]
      %v275 = vunpack.c.l.b16 %v207
      %v276 = vunpack.c.h.b16 %v207
      %v277 = vunpack.c.l.b16 %v208
      %v278 = vunpack.c.h.b16 %v208
      %v279 = vunpack.c.l.b16 %v209
      %v280 = vunpack.c.h.b16 %v209
      %v281 = vunpack.c.l.b16 %v210
      %v282 = vunpack.c.h.b16 %v210
      %v283 = vunpack.c.l.b16 %v211
      %v284 = vunpack.c.h.b16 %v211
      %v285 = vunpack.c.l.b16 %v212
      %v286 = vunpack.c.h.b16 %v212
      %v287 = vunpack.c.l.b16 %v213
      %v288 = vunpack.c.h.b16 %v213
      %v289 = vunpack.c.l.b16 %v214
      %v290 = vunpack.c.h.b16 %v214
      %v291 = vunpack.c.l.b16 %v215
      %v292 = vunpack.c.h.b16 %v215
      %v293 = vunpack.c.l.b16 %v216
      %v294 = vunpack.c.h.b16 %v216
      %v295 = vunpack.c.l.b16 %v217
      %v296 = vunpack.c.h.b16 %v217
      %v297 = vunpack.c.l.b16 %v218
      %v298 = vunpack.c.h.b16 %v218
      %v299 = vunpack.c.l.b16 %v219
      %v300 = vunpack.c.h.b16 %v219
      %v301 = vunpack.c.l.b16 %v220
      %v302 = vunpack.c.h.b16 %v220
      %v303 = vunpack.c.l.b16 %v221
      %v304 = vunpack.c.h.b16 %v221
      %v305 = vunpack.c.l.b16 %v222
      %v306 = vunpack.c.h.b16 %v222
      %v307 = vpack.c.b16 %v277, %v275
      %v308 = vpack.c.b16 %v278, %v276
      %v309 = vpack.c.b16 %v281, %v279
      %v310 = vpack.c.b16 %v282, %v280
      %v311 = vpack.c.b16 %v285, %v283
      %v312 = vpack.c.b16 %v286, %v284
      %v313 = vpack.c.b16 %v289, %v287
      %v314 = vpack.c.b16 %v290, %v288
      %v315 = vpack.c.b16 %v293, %v291
      %v316 = vpack.c.b16 %v294, %v292
      %v317 = vpack.c.b16 %v297, %v295
      %v318 = vpack.c.b16 %v298, %v296
      %v319 = vpack.c.b16 %v301, %v299
      %v320 = vpack.c.b16 %v302, %v300
      %v321 = vpack.c.b16 %v305, %v303
      %v322 = vpack.c.b16 %v306, %v304
      %v371 = vunpack.c.l.b16 %v227
      %v372 = vunpack.c.l.b16 %v228
      %v373 = vunpack.c.l.b16 %v229
      %v374 = vunpack.c.l.b16 %v230
      %v375 = vunpack.c.l.b16 %v231
      %v376 = vunpack.c.l.b16 %v232
      %v377 = vunpack.c.l.b16 %v233
      %v378 = vunpack.c.l.b16 %v234
      %v379 = vunpack.c.l.b16 %v235
      %v380 = vunpack.c.l.b16 %v236
      %v381 = vunpack.c.l.b16 %v237
      %v382 = vunpack.c.l.b16 %v238
      %v383 = vunpack.c.l.b16 %v239
      %v384 = vunpack.c.l.b16 %v240
      %v385 = vunpack.c.l.b16 %v241
      %v386 = vunpack.c.l.b16 %v242
      %v387 = vunpack.c.l.b16 %v243
      %v388 = vunpack.c.l.b16 %v244
      %v389 = vunpack.c.l.b16 %v245
      %v390 = vunpack.c.l.b16 %v246
      %v391 = vunpack.c.l.b16 %v247
      %v392 = vunpack.c.l.b16 %v248
      %v393 = vunpack.c.l.b16 %v249
      %v394 = vunpack.c.l.b16 %v250
      %v395 = vunpack.c.l.b16 %v251
      %v396 = vunpack.c.l.b16 %v252
      %v397 = vunpack.c.l.b16 %v253
      %v398 = vunpack.c.l.b16 %v254
      %v399 = vunpack.c.l.b16 %v255
      %v400 = vunpack.c.l.b16 %v256
      %v401 = vunpack.c.l.b16 %v257
      %v402 = vunpack.c.l.b16 %v258
      %v403 = vpack.c.b16 %v372, %v371
      %v404 = vpack.c.b16 %v374, %v373
      %v405 = vpack.c.b16 %v376, %v375
      %v406 = vpack.c.b16 %v378, %v377
      %v407 = vpack.c.b16 %v380, %v379
      %v408 = vpack.c.b16 %v382, %v381
      %v409 = vpack.c.b16 %v384, %v383
      %v410 = vpack.c.b16 %v386, %v385
      %v411 = vpack.c.b16 %v388, %v387
      %v412 = vpack.c.b16 %v390, %v389
      %v413 = vpack.c.b16 %v392, %v391
      %v414 = vpack.c.b16 %v394, %v393
      %v415 = vpack.c.b16 %v396, %v395
      %v416 = vpack.c.b16 %v398, %v397
      %v417 = vpack.c.b16 %v400, %v399
      %v418 = vpack.c.b16 %v402, %v401
      %435 = vmatprep.subr.bf16.mxu0 0
      %436 = vmatpush1.bf16.msra.mxu0 %v403
      %437 = vmatprep.subr.bf16.mxu0 0
      %438 = vmatpush1.bf16.msra.mxu0 %v404
      %439 = vmatprep.subr.bf16.mxu0 0
      %440 = vmatpush1.bf16.msra.mxu0 %v405
      %441 = vmatprep.subr.bf16.mxu0 0
      %442 = vmatpush1.bf16.msra.mxu0 %v406
      %443 = vmatprep.subr.bf16.mxu0 0
      %444 = vmatpush1.bf16.msra.mxu0 %v407
      %445 = vmatprep.subr.bf16.mxu0 0
      %446 = vmatpush1.bf16.msra.mxu0 %v408
      %447 = vmatprep.subr.bf16.mxu0 0
      %448 = vmatpush1.bf16.msra.mxu0 %v409
      %449 = vmatprep.subr.bf16.mxu0 0
      %450 = vmatpush1.bf16.msra.mxu0 %v410
      %451 = vmatprep.subr.bf16.mxu0 0
      %452 = vmatpush1.bf16.msra.mxu0 %v411
      %453 = vmatprep.subr.bf16.mxu0 0
      %454 = vmatpush1.bf16.msra.mxu0 %v412
      %455 = vmatprep.subr.bf16.mxu0 0
      %456 = vmatpush1.bf16.msra.mxu0 %v413
      %457 = vmatprep.subr.bf16.mxu0 0
      %458 = vmatpush1.bf16.msra.mxu0 %v414
      %459 = vmatprep.subr.bf16.mxu0 0
      %460 = vmatpush1.bf16.msra.mxu0 %v415
      %461 = vmatprep.subr.bf16.mxu0 0
      %462 = vmatpush1.bf16.msra.mxu0 %v416
      %463 = vmatprep.subr.bf16.mxu0 0
      %464 = vmatpush1.bf16.msra.mxu0 %v417
      %465 = vmatprep.subr.bf16.mxu0 0
      %466 = vmatpush1.bf16.msra.mxu0 %v418
      %467 = vmatprep.mubr.bf16.mxu0 %v308
      %468 = vmatmul.mubr.bf16.gmra.mrb[0].mxu0 %v307
      %v469 = vpop.f32.mrb[0].mxu0
      %v470 = vadd.f32 0.0, %v469
      %v471 = vpop.f32.mrb[0].mxu0
      %v472 = vpop.f32.mrb[0].mxu0
      %v473 = vadd.f32 0.0, %v472
      %v474 = vpop.f32.mrb[0].mxu0
      %475 = vmatprep.mubr.bf16.mxu0 %v310
      %476 = vmatmul.mubr.bf16.gmra.mrb[0].mxu0 %v309
      %v477 = vpop.f32.mrb[0].mxu0
      %v478 = vadd.f32 0.0, %v477
      %v479 = vpop.f32.mrb[0].mxu0
      %v480 = vpop.f32.mrb[0].mxu0
      %v481 = vadd.f32 0.0, %v480
      %v482 = vpop.f32.mrb[0].mxu0
      %483 = vmatprep.mubr.bf16.mxu0 %v312
      %484 = vmatmul.mubr.bf16.gmra.mrb[0].mxu0 %v311
      %v485 = vpop.f32.mrb[0].mxu0
      %v486 = vadd.f32 0.0, %v485
      %v487 = vpop.f32.mrb[0].mxu0
      %v488 = vpop.f32.mrb[0].mxu0
      %v489 = vadd.f32 0.0, %v488
      %v490 = vpop.f32.mrb[0].mxu0
      %491 = vmatprep.mubr.bf16.mxu0 %v314
      %492 = vmatmul.mubr.bf16.gmra.mrb[0].mxu0 %v313
      %v493 = vpop.f32.mrb[0].mxu0
      %v494 = vadd.f32 0.0, %v493
      %v495 = vpop.f32.mrb[0].mxu0
      %v496 = vpop.f32.mrb[0].mxu0
      %v497 = vadd.f32 0.0, %v496
      %v498 = vpop.f32.mrb[0].mxu0
      %499 = vmatprep.mubr.bf16.mxu0 %v316
      %500 = vmatmul.mubr.bf16.gmra.mrb[0].mxu0 %v315
      %v501 = vpop.f32.mrb[0].mxu0
      %v502 = vadd.f32 0.0, %v501
      %v503 = vpop.f32.mrb[0].mxu0
      %v504 = vpop.f32.mrb[0].mxu0
      %v505 = vadd.f32 0.0, %v504
      %v506 = vpop.f32.mrb[0].mxu0
      %507 = vmatprep.mubr.bf16.mxu0 %v318
      %508 = vmatmul.mubr.bf16.gmra.mrb[0].mxu0 %v317
      %v509 = vpop.f32.mrb[0].mxu0
      %v510 = vadd.f32 0.0, %v509
      %v511 = vpop.f32.mrb[0].mxu0
      %v512 = vpop.f32.mrb[0].mxu0
      %v513 = vadd.f32 0.0, %v512
      %v514 = vpop.f32.mrb[0].mxu0
      %515 = vmatprep.mubr.bf16.mxu0 %v320
      %516 = vmatmul.mubr.bf16.gmra.mrb[0].mxu0 %v319
      %v517 = vpop.f32.mrb[0].mxu0
      %v518 = vadd.f32 0.0, %v517
      %v519 = vpop.f32.mrb[0].mxu0
      %v520 = vpop.f32.mrb[0].mxu0
      %v521 = vadd.f32 0.0, %v520
      %v522 = vpop.f32.mrb[0].mxu0
      %523 = vmatprep.mubr.bf16.mxu0 %v322
      %524 = vmatmul.mubr.bf16.gmra.mrb[0].mxu0 %v321
      %v525 = vpop.f32.mrb[0].mxu0
      %v526 = vadd.f32 0.0, %v525
      %v527 = vpop.f32.mrb[0].mxu0
      %v528 = vpop.f32.mrb[0].mxu0
      %v529 = vadd.f32 0.0, %v528
      %v530 = vpop.f32.mrb[0].mxu0
      %531 = vdwg.mxu0
      %p532 = scmp.eq.s32.totalorder %s19, 0
      // Predicated region
      $region33: #{gcn_forward.11} parent=31 // pred_check
        %p533 = pneg %p532
      $region34: #{gcn_forward.11} parent=31 // pred_check_branch
        %535 = sbr.rel (%p533) target = $region36
      $region35: #{gcn_forward.11} parent=31 // pred_region
        %536 = vst [vmem:[#allocation2] sm:$0xff] %v470
        %537 = vst [vmem:[#allocation2 + $0x8] sm:$0xff] %v473
        %538 = vst [vmem:[#allocation2 + $0x10] sm:$0xff] %v478
        %539 = vst [vmem:[#allocation2 + $0x18] sm:$0xff] %v481
        %540 = vst [vmem:[#allocation2 + $0x20] sm:$0xff] %v486
        %541 = vst [vmem:[#allocation2 + $0x28] sm:$0xff] %v489
        %542 = vst [vmem:[#allocation2 + $0x30] sm:$0xff] %v494
        %543 = vst [vmem:[#allocation2 + $0x38] sm:$0xff] %v497
        %544 = vst [vmem:[#allocation2 + $0x40] sm:$0xff] %v502
        %545 = vst [vmem:[#allocation2 + $0x48] sm:$0xff] %v505
        %546 = vst [vmem:[#allocation2 + $0x50] sm:$0xff] %v510
        %547 = vst [vmem:[#allocation2 + $0x58] sm:$0xff] %v513
        %548 = vst [vmem:[#allocation2 + $0x60] sm:$0xff] %v518
        %549 = vst [vmem:[#allocation2 + $0x68] sm:$0xff] %v521
        %550 = vst [vmem:[#allocation2 + $0x70] sm:$0xff] %v526
        %551 = vst [vmem:[#allocation2 + $0x78] sm:$0xff] %v529
      $region36: #{gcn_forward.11} parent=31 // pred_fallthru
        _
      %p552 = scmp.gt.s32.totalorder %s19, 0
      // Predicated region
      $region37: #{gcn_forward.11} parent=31 // pred_check
        %p553 = pneg %p552
      $region38: #{gcn_forward.11} parent=31 // pred_check_branch
        %555 = sbr.rel (%p553) target = $region40
      $region39: #{gcn_forward.11} parent=31 // pred_region
        %v556 = vld [vmem:[#allocation2] sm:$0xff]
        %v557 = vld [vmem:[#allocation2 + $0x8] sm:$0xff]
        %v558 = vld [vmem:[#allocation2 + $0x10] sm:$0xff]
        %v559 = vld [vmem:[#allocation2 + $0x18] sm:$0xff]
        %v560 = vld [vmem:[#allocation2 + $0x20] sm:$0xff]
        %v561 = vld [vmem:[#allocation2 + $0x28] sm:$0xff]
        %v562 = vld [vmem:[#allocation2 + $0x30] sm:$0xff]
        %v563 = vld [vmem:[#allocation2 + $0x38] sm:$0xff]
        %v564 = vld [vmem:[#allocation2 + $0x40] sm:$0xff]
        %v565 = vld [vmem:[#allocation2 + $0x48] sm:$0xff]
        %v566 = vld [vmem:[#allocation2 + $0x50] sm:$0xff]
        %v567 = vld [vmem:[#allocation2 + $0x58] sm:$0xff]
        %v568 = vld [vmem:[#allocation2 + $0x60] sm:$0xff]
        %v569 = vld [vmem:[#allocation2 + $0x68] sm:$0xff]
        %v570 = vld [vmem:[#allocation2 + $0x70] sm:$0xff]
        %v571 = vld [vmem:[#allocation2 + $0x78] sm:$0xff]
        %v572 = vadd.f32 %v556, %v470
        %v573 = vadd.f32 %v557, %v473
        %v574 = vadd.f32 %v558, %v478
        %v575 = vadd.f32 %v559, %v481
        %v576 = vadd.f32 %v560, %v486
        %v577 = vadd.f32 %v561, %v489
        %v578 = vadd.f32 %v562, %v494
        %v579 = vadd.f32 %v563, %v497
        %v580 = vadd.f32 %v564, %v502
        %v581 = vadd.f32 %v565, %v505
        %v582 = vadd.f32 %v566, %v510
        %v583 = vadd.f32 %v567, %v513
        %v584 = vadd.f32 %v568, %v518
        %v585 = vadd.f32 %v569, %v521
        %v586 = vadd.f32 %v570, %v526
        %v587 = vadd.f32 %v571, %v529
        %588 = vst [vmem:[#allocation2] sm:$0xff] %v572
        %589 = vst [vmem:[#allocation2 + $0x8] sm:$0xff] %v573
        %590 = vst [vmem:[#allocation2 + $0x10] sm:$0xff] %v574
        %591 = vst [vmem:[#allocation2 + $0x18] sm:$0xff] %v575
        %592 = vst [vmem:[#allocation2 + $0x20] sm:$0xff] %v576
        %593 = vst [vmem:[#allocation2 + $0x28] sm:$0xff] %v577
        %594 = vst [vmem:[#allocation2 + $0x30] sm:$0xff] %v578
        %595 = vst [vmem:[#allocation2 + $0x38] sm:$0xff] %v579
        %596 = vst [vmem:[#allocation2 + $0x40] sm:$0xff] %v580
        %597 = vst [vmem:[#allocation2 + $0x48] sm:$0xff] %v581
        %598 = vst [vmem:[#allocation2 + $0x50] sm:$0xff] %v582
        %599 = vst [vmem:[#allocation2 + $0x58] sm:$0xff] %v583
        %600 = vst [vmem:[#allocation2 + $0x60] sm:$0xff] %v584
        %601 = vst [vmem:[#allocation2 + $0x68] sm:$0xff] %v585
        %602 = vst [vmem:[#allocation2 + $0x70] sm:$0xff] %v586
        %603 = vst [vmem:[#allocation2 + $0x78] sm:$0xff] %v587
      $region40: #{gcn_forward.11} parent=31 // pred_fallthru
        _
      // Predicated region
      $region41: #{gcn_forward.11} parent=31 // pred_check
        %p604 = pneg %p532
      $region42: #{gcn_forward.11} parent=31 // pred_check_branch
        %606 = sbr.rel (%p604) target = $region44
      $region43: #{gcn_forward.11} parent=31 // pred_region
        %v607 = vld [vmem:[#allocation2] sm:$0xff]
        %v608 = vld [vmem:[#allocation2 + $0x8] sm:$0xff]
        %v609 = vld [vmem:[#allocation2 + $0x10] sm:$0xff]
        %v610 = vld [vmem:[#allocation2 + $0x18] sm:$0xff]
        %v611 = vld [vmem:[#allocation2 + $0x20] sm:$0xff]
        %v612 = vld [vmem:[#allocation2 + $0x28] sm:$0xff]
        %v613 = vld [vmem:[#allocation2 + $0x30] sm:$0xff]
        %v614 = vld [vmem:[#allocation2 + $0x38] sm:$0xff]
        %v615 = vld [vmem:[#allocation2 + $0x40] sm:$0xff]
        %v616 = vld [vmem:[#allocation2 + $0x48] sm:$0xff]
        %v617 = vld [vmem:[#allocation2 + $0x50] sm:$0xff]
        %v618 = vld [vmem:[#allocation2 + $0x58] sm:$0xff]
        %v619 = vld [vmem:[#allocation2 + $0x60] sm:$0xff]
        %v620 = vld [vmem:[#allocation2 + $0x68] sm:$0xff]
        %v621 = vld [vmem:[#allocation2 + $0x70] sm:$0xff]
        %v622 = vld [vmem:[#allocation2 + $0x78] sm:$0xff]
        %v623 = vld [vmem:[%s2] sm:$0x1]
        %v625 = vlaneseq
        %v626 = vshrl.u32 %v625, 7
        %v627 = vsub.s32 0, %v626
        %v628 = vrot.slane %v623, %v627
        %v630 = vadd.f32 %v607, %v628
        %v631 = vadd.f32 %v608, %v628
        %v632 = vadd.f32 %v609, %v628
        %v633 = vadd.f32 %v610, %v628
        %v634 = vadd.f32 %v611, %v628
        %v635 = vadd.f32 %v612, %v628
        %v636 = vadd.f32 %v613, %v628
        %v637 = vadd.f32 %v614, %v628
        %v638 = vadd.f32 %v615, %v628
        %v639 = vadd.f32 %v616, %v628
        %v640 = vadd.f32 %v617, %v628
        %v641 = vadd.f32 %v618, %v628
        %v642 = vadd.f32 %v619, %v628
        %v643 = vadd.f32 %v620, %v628
        %v644 = vadd.f32 %v621, %v628
        %v645 = vadd.f32 %v622, %v628
        %v646 = vlaneseq
        %v647 = vand.u32 %v646, 127
        %vm648 = vcmp.lt.s32.totalorder %v647, 8
        %v649 = vsel %vm648, %v630, -inf
        %v650 = vsel %vm648, %v631, -inf
        %v651 = vsel %vm648, %v632, -inf
        %v652 = vsel %vm648, %v633, -inf
        %v653 = vsel %vm648, %v634, -inf
        %v654 = vsel %vm648, %v635, -inf
        %v655 = vsel %vm648, %v636, -inf
        %v656 = vsel %vm648, %v637, -inf
        %v657 = vsel %vm648, %v638, -inf
        %v658 = vsel %vm648, %v639, -inf
        %v659 = vsel %vm648, %v640, -inf
        %v660 = vsel %vm648, %v641, -inf
        %v661 = vsel %vm648, %v642, -inf
        %v662 = vsel %vm648, %v643, -inf
        %v663 = vsel %vm648, %v644, -inf
        %v664 = vsel %vm648, %v645, -inf
        %665 = vmax.xlane.f32.xlu0 %v649
        %v666 = vpop.xlane.xlu0 %665
        %667 = vmax.xlane.f32.xlu0 %v650
        %v668 = vpop.xlane.xlu0 %667
        %669 = vmax.xlane.f32.xlu0 %v651
        %v670 = vpop.xlane.xlu0 %669
        %671 = vmax.xlane.f32.xlu0 %v652
        %v672 = vpop.xlane.xlu0 %671
        %673 = vmax.xlane.f32.xlu0 %v653
        %v674 = vpop.xlane.xlu0 %673
        %675 = vmax.xlane.f32.xlu0 %v654
        %v676 = vpop.xlane.xlu0 %675
        %677 = vmax.xlane.f32.xlu0 %v655
        %v678 = vpop.xlane.xlu0 %677
        %679 = vmax.xlane.f32.xlu0 %v656
        %v680 = vpop.xlane.xlu0 %679
        %681 = vmax.xlane.f32.xlu0 %v657
        %v682 = vpop.xlane.xlu0 %681
        %683 = vmax.xlane.f32.xlu0 %v658
        %v684 = vpop.xlane.xlu0 %683
        %685 = vmax.xlane.f32.xlu0 %v659
        %v686 = vpop.xlane.xlu0 %685
        %687 = vmax.xlane.f32.xlu0 %v660
        %v688 = vpop.xlane.xlu0 %687
        %689 = vmax.xlane.f32.xlu0 %v661
        %v690 = vpop.xlane.xlu0 %689
        %691 = vmax.xlane.f32.xlu0 %v662
        %v692 = vpop.xlane.xlu0 %691
        %693 = vmax.xlane.f32.xlu0 %v663
        %v694 = vpop.xlane.xlu0 %693
        %695 = vmax.xlane.f32.xlu0 %v664
        %v696 = vpop.xlane.xlu0 %695
        %v697 = vsub.f32 %v649, %v666
        %v698 = vsub.f32 %v650, %v668
        %v699 = vsub.f32 %v651, %v670
        %v700 = vsub.f32 %v652, %v672
        %v701 = vsub.f32 %v653, %v674
        %v702 = vsub.f32 %v654, %v676
        %v703 = vsub.f32 %v655, %v678
        %v704 = vsub.f32 %v656, %v680
        %v705 = vsub.f32 %v657, %v682
        %v706 = vsub.f32 %v658, %v684
        %v707 = vsub.f32 %v659, %v686
        %v708 = vsub.f32 %v660, %v688
        %v709 = vsub.f32 %v661, %v690
        %v710 = vsub.f32 %v662, %v692
        %v711 = vsub.f32 %v663, %v694
        %v712 = vsub.f32 %v664, %v696
        %v713 = vmul.f32 %v697, 1.442695
        %v714 = vpow.pop %v713
        %v715 = vmul.f32 %v698, 1.442695
        %v716 = vpow.pop %v715
        %v717 = vmul.f32 %v699, 1.442695
        %v718 = vpow.pop %v717
        %v719 = vmul.f32 %v700, 1.442695
        %v720 = vpow.pop %v719
        %v721 = vmul.f32 %v701, 1.442695
        %v722 = vpow.pop %v721
        %v723 = vmul.f32 %v702, 1.442695
        %v724 = vpow.pop %v723
        %v725 = vmul.f32 %v703, 1.442695
        %v726 = vpow.pop %v725
        %v727 = vmul.f32 %v704, 1.442695
        %v728 = vpow.pop %v727
        %v729 = vmul.f32 %v705, 1.442695
        %v730 = vpow.pop %v729
        %v731 = vmul.f32 %v706, 1.442695
        %v732 = vpow.pop %v731
        %v733 = vmul.f32 %v707, 1.442695
        %v734 = vpow.pop %v733
        %v735 = vmul.f32 %v708, 1.442695
        %v736 = vpow.pop %v735
        %v737 = vmul.f32 %v709, 1.442695
        %v738 = vpow.pop %v737
        %v739 = vmul.f32 %v710, 1.442695
        %v740 = vpow.pop %v739
        %v741 = vmul.f32 %v711, 1.442695
        %v742 = vpow.pop %v741
        %v743 = vmul.f32 %v712, 1.442695
        %v744 = vpow.pop %v743
        %745 = vadd.xlane.f32.xlu0 %v714
        %v746 = vpop.xlane.xlu0 %745
        %747 = vadd.xlane.f32.xlu0 %v716
        %v748 = vpop.xlane.xlu0 %747
        %749 = vadd.xlane.f32.xlu0 %v718
        %v750 = vpop.xlane.xlu0 %749
        %751 = vadd.xlane.f32.xlu0 %v720
        %v752 = vpop.xlane.xlu0 %751
        %753 = vadd.xlane.f32.xlu0 %v722
        %v754 = vpop.xlane.xlu0 %753
        %755 = vadd.xlane.f32.xlu0 %v724
        %v756 = vpop.xlane.xlu0 %755
        %757 = vadd.xlane.f32.xlu0 %v726
        %v758 = vpop.xlane.xlu0 %757
        %759 = vadd.xlane.f32.xlu0 %v728
        %v760 = vpop.xlane.xlu0 %759
        %761 = vadd.xlane.f32.xlu0 %v730
        %v762 = vpop.xlane.xlu0 %761
        %763 = vadd.xlane.f32.xlu0 %v732
        %v764 = vpop.xlane.xlu0 %763
        %765 = vadd.xlane.f32.xlu0 %v734
        %v766 = vpop.xlane.xlu0 %765
        %767 = vadd.xlane.f32.xlu0 %v736
        %v768 = vpop.xlane.xlu0 %767
        %769 = vadd.xlane.f32.xlu0 %v738
        %v770 = vpop.xlane.xlu0 %769
        %771 = vadd.xlane.f32.xlu0 %v740
        %v772 = vpop.xlane.xlu0 %771
        %773 = vadd.xlane.f32.xlu0 %v742
        %v774 = vpop.xlane.xlu0 %773
        %775 = vadd.xlane.f32.xlu0 %v744
        %v776 = vpop.xlane.xlu0 %775
        %v777 = vlog2.pop %v746
        %v778 = vmul.f32 %v777, 0.6931472
        %v779 = vlog2.pop %v748
        %v780 = vmul.f32 %v779, 0.6931472
        %v781 = vlog2.pop %v750
        %v782 = vmul.f32 %v781, 0.6931472
        %v783 = vlog2.pop %v752
        %v784 = vmul.f32 %v783, 0.6931472
        %v785 = vlog2.pop %v754
        %v786 = vmul.f32 %v785, 0.6931472
        %v787 = vlog2.pop %v756
        %v788 = vmul.f32 %v787, 0.6931472
        %v789 = vlog2.pop %v758
        %v790 = vmul.f32 %v789, 0.6931472
        %v791 = vlog2.pop %v760
        %v792 = vmul.f32 %v791, 0.6931472
        %v793 = vlog2.pop %v762
        %v794 = vmul.f32 %v793, 0.6931472
        %v795 = vlog2.pop %v764
        %v796 = vmul.f32 %v795, 0.6931472
        %v797 = vlog2.pop %v766
        %v798 = vmul.f32 %v797, 0.6931472
        %v799 = vlog2.pop %v768
        %v800 = vmul.f32 %v799, 0.6931472
        %v801 = vlog2.pop %v770
        %v802 = vmul.f32 %v801, 0.6931472
        %v803 = vlog2.pop %v772
        %v804 = vmul.f32 %v803, 0.6931472
        %v805 = vlog2.pop %v774
        %v806 = vmul.f32 %v805, 0.6931472
        %v807 = vlog2.pop %v776
        %v808 = vmul.f32 %v807, 0.6931472
        %v809 = vsub.f32 %v697, %v778
        %v810 = vsub.f32 %v698, %v780
        %v811 = vsub.f32 %v699, %v782
        %v812 = vsub.f32 %v700, %v784
        %v813 = vsub.f32 %v701, %v786
        %v814 = vsub.f32 %v702, %v788
        %v815 = vsub.f32 %v703, %v790
        %v816 = vsub.f32 %v704, %v792
        %v817 = vsub.f32 %v705, %v794
        %v818 = vsub.f32 %v706, %v796
        %v819 = vsub.f32 %v707, %v798
        %v820 = vsub.f32 %v708, %v800
        %v821 = vsub.f32 %v709, %v802
        %v822 = vsub.f32 %v710, %v804
        %v823 = vsub.f32 %v711, %v806
        %v824 = vsub.f32 %v712, %v808
        %825 = vst [vmem:[%s203] sm:$0xff] %v809
        %826 = vst [vmem:[%s203 + $0x8] sm:$0xff] %v810
        %827 = vst [vmem:[%s203 + $0x10] sm:$0xff] %v811
        %828 = vst [vmem:[%s203 + $0x18] sm:$0xff] %v812
        %829 = vst [vmem:[%s203 + $0x20] sm:$0xff] %v813
        %830 = vst [vmem:[%s203 + $0x28] sm:$0xff] %v814
        %831 = vst [vmem:[%s203 + $0x30] sm:$0xff] %v815
        %832 = vst [vmem:[%s203 + $0x38] sm:$0xff] %v816
        %833 = vst [vmem:[%s203 + $0x40] sm:$0xff] %v817
        %834 = vst [vmem:[%s203 + $0x48] sm:$0xff] %v818
        %835 = vst [vmem:[%s203 + $0x50] sm:$0xff] %v819
        %836 = vst [vmem:[%s203 + $0x58] sm:$0xff] %v820
        %837 = vst [vmem:[%s203 + $0x60] sm:$0xff] %v821
        %838 = vst [vmem:[%s203 + $0x68] sm:$0xff] %v822
        %839 = vst [vmem:[%s203 + $0x70] sm:$0xff] %v823
        %840 = vst [vmem:[%s203 + $0x78] sm:$0xff] %v824
      $region44: #{gcn_forward.11} parent=31 // pred_fallthru
        _
      %s841 = smul.u32 16, %s18
      %p842 = scmp.lt.s32.totalorder %s841, 31
      %s843 = scalar_select %p842, %s841, 31
      %s844 = smul.addr %s843, 8
      %s845 = scalar_lea.vmem %s3, %s844
      // Predicated region
      $region45: #{gcn_forward.11} parent=31 // pred_check
        %p846 = pneg %p114
      $region46: #{gcn_forward.11} parent=31 // pred_check_branch
        %848 = sbr.rel (%p846) target = $region48
      $region47: #{gcn_forward.11} parent=31 // pred_region
        %s849 = smul.u32 16, %s18
      $region48: #{gcn_forward.11} parent=31 // pred_fallthru
        _
    $region32: #{gcn_forward.11} parent=5 // pred_fallthru
      _
    %p850 = scmp.le.s32.totalorder 2, %s9
    // Predicated region
    $region49: #{gcn_forward.11} parent=5 // pred_check
      %p851 = pneg %p850
    $region50: #{gcn_forward.11} parent=5 // pred_check_branch
      %853 = sbr.rel (%p851) target = $region52
    $region51: #{gcn_forward.11} parent=5 // pred_region
      %s854 = ssub.s32 %s9, 2
      // Predicated region
      $region53: #{gcn_forward.11} parent=51 // pred_check
        %p855 = pneg %p120
      $region54: #{gcn_forward.11} parent=51 // pred_check_branch
        %857 = sbr.rel (%p855) target = $region56
      $region55: #{gcn_forward.11} parent=51 // pred_region
        %s858 = smul.u32 16, %s20
        %p859 = scmp.lt.s32.totalorder %s858, 31
        %s860 = scalar_select %p859, %s858, 31
        %s861 = smul.addr %s860, 8
        %s862 = scalar_lea.vmem %s3, %s861
      $region56: #{gcn_forward.11} parent=51 // pred_fallthru
        _
    $region52: #{gcn_forward.11} parent=5 // pred_fallthru
      _
  $region6: #{gcn_forward.11} parent=0 // loop_footer
    %s13 = sadd.s32 1, %s9
  $region7: #{gcn_forward.11} parent=0 // loop_footer_branch
    %8 = sbr.rel target = $region3
  $region8: #{gcn_forward.11} parent=0 // loop_exit
    _

</llo_original>
